<compile_context>
chip_gen: v7x
topology: tpu7x:2x2x1
jax: 0.10.0
libtpu: 0.0.40
codegen_flags: <defaults>
</compile_context>

<pallas_src>
import numpy as np
import jax
import jax.numpy as jnp
from jax.experimental import pallas as pl
from jax.experimental.pallas import tpu as pltpu

# ----------------------------- configuration ---------------------------------
B = 2            # batch
H = W = 7        # feature-map spatial size (as documented in PredictionNetwork)
PATCH = 8        # backbone stand-in patch size -> images are (B, 3, 56, 56)
IN_DIM = 128     # reduced from 1280 for a small synthetic run
HIDDEN = 128     # PredictionNetwork hidden_dim
NUM_CLASSES = 20
ANCHOR_LIST = np.array([[1.0, 1], [2, 2], [3, 3], [4, 4], [5, 5],
                        [2, 3], [3, 2], [3, 5], [5, 3]], dtype=np.float32)
A = ANCHOR_LIST.shape[0]
DOUT = 5 * A + NUM_CLASSES          # 65
DOUT_PAD = 128                      # lane-dense padded head output channels
N_GT = 3                            # GT boxes per image (all valid, no -1 padding)

HW = H * W                          # 49
AHW = A * HW                        # 441
AHW_PAD = 512                       # lane-dense padded anchor axis
M_ROWS = B * HW                     # 98
M_ROWS_PAD = 128                    # padded row count for the fused head matmuls
K_IN = PATCH * PATCH * 3            # 192


def _vmem():
    return pl.BlockSpec(memory_space=pltpu.MemorySpace.VMEM)


# ------------------------------ Pallas kernels --------------------------------
def fused_head_kernel(x_ref, wf_ref, bf_ref, w1_ref, b1_ref, w2_ref, b2_ref, o_ref):
    """Backbone stand-in projection + PredictionNetwork head, fully fused.

    x:(128,192)bf16  wf:(192,128)bf16  w1:(128,128)bf16  w2:(128,128)bf16
    biases f32. Three back-to-back MXU matmuls (bf16 in, f32 accumulate); all
    elementwise math in f32 (v5e-friendly).  Output (128,128) f32, lane-dense.
    """
    # backbone stand-in: linear + ReLU
    f = jnp.dot(x_ref[...], wf_ref[...], preferred_element_type=jnp.float32) + bf_ref[...]
    f = jnp.maximum(f, 0.0)
    # conv1x1 -> (Dropout2d treated as identity) -> LeakyReLU -> conv1x1
    # TODO(synk): nn.Dropout2d(0.3) is stochastic in train mode; treated as identity (eval mode).
    h = jnp.dot(f.astype(jnp.bfloat16), w1_ref[...], preferred_element_type=jnp.float32) + b1_ref[...]
    h = jnp.where(h > 0, h, 0.01 * h)                        # LeakyReLU(0.01)
    y = jnp.dot(h.astype(jnp.bfloat16), w2_ref[...], preferred_element_type=jnp.float32) + b2_ref[...]

    # channel masks built in-kernel from iota (compile-time pattern, no mask DMAs)
    c = jax.lax.broadcasted_iota(jnp.int32, y.shape, 1)
    d = c % 5
    is_anchor = c < 5 * A
    sig_mask = is_anchor & (d < 3)                           # sigmoid on d in {0,1,2}
    sub_mask = is_anchor & ((d == 1) | (d == 2))             # then shift d in {1,2} by -0.5

    # sigmoid only where needed (exp argument forced to 0 elsewhere -> never inf)
    sig = 1.0 / (1.0 + jnp.exp(-jnp.where(sig_mask, y, 0.0)))
    y = jnp.where(sig_mask, sig, y)
    y = jnp.where(sub_mask, y - 0.5, y)
    o_ref[...] = y


def iou_kernel(anc_ref, box_ref, o_ref):
    """IoU(anchors, GT boxes).

    anc_ref: (4, B, AHW_PAD) coord-major anchors (x1,y1,x2,y2), anchor axis
             zero-padded to 512 lanes.
    box_ref: (B, N, 5) GT boxes.
    o_ref:   (B, N, AHW_PAD) lane-dense IoU matrix.
    """
    anc = anc_ref[...]
    box = box_ref[...]
    ax1 = anc[0][:, None, :]; ay1 = anc[1][:, None, :]       # (B,1,AHW_PAD)
    ax2 = anc[2][:, None, :]; ay2 = anc[3][:, None, :]
    bx1 = box[:, :, 0:1]; by1 = box[:, :, 1:2]               # (B,N,1)
    bx2 = box[:, :, 2:3]; by2 = box[:, :, 3:4]
    ix1 = jnp.maximum(ax1, bx1); iy1 = jnp.maximum(ay1, by1)
    ix2 = jnp.minimum(ax2, bx2); iy2 = jnp.minimum(ay2, by2)
    iw = jnp.maximum(ix2 - ix1, 0.0); ih = jnp.maximum(iy2 - iy1, 0.0)
    inter = iw * ih
    pa = (ax2 - ax1) * (ay2 - ay1)
    ba = (bx2 - bx1) * (by2 - by1)
    o_ref[...] = inter / jnp.maximum(pa + ba - inter, 1e-8)  # eps guards padded lanes


# ------------------------------ Pallas wrappers --------------------------------
def pallas_fused_head(x_pad, wf, bf, w1, b1, w2p, b2p):
    return pl.pallas_call(
        fused_head_kernel,
        out_shape=jax.ShapeDtypeStruct((M_ROWS_PAD, DOUT_PAD), jnp.float32),
        in_specs=[_vmem()] * 7,
        out_specs=_vmem(),
    )(x_pad, wf, bf, w1, b1, w2p, b2p)


def pallas_iou(anc_cm, bboxes):
    """anc_cm: (4, B, AHW_PAD); bboxes: (B, N, 5) -> iou (B, N, AHW_PAD)."""
    batch, n = bboxes.shape[0], bboxes.shape[1]
    return pl.pallas_call(
        iou_kernel,
        out_shape=jax.ShapeDtypeStruct((batch, n, AHW_PAD), jnp.float32),
        in_specs=[_vmem()] * 2,
        out_specs=_vmem(),
    )(anc_cm, bboxes)


# ------------------------------ JAX glue ---------------------------------------
def generate_grid(batch_size, h_amap=H, w_amap=W):
    w_range = jnp.arange(w_amap, dtype=jnp.float32) + 0.5
    h_range = jnp.arange(h_amap, dtype=jnp.float32) + 0.5
    wg = jnp.broadcast_to(w_range[None, :], (h_amap, w_amap))
    hg = jnp.broadcast_to(h_range[:, None], (h_amap, w_amap))
    grid = jnp.stack([wg, hg], axis=-1)
    return jnp.broadcast_to(grid[None], (batch_size, h_amap, w_amap, 2))


def generate_anchor(anc, grid):
    g = grid[:, None, :, :, :]                 # (B,1,H,W,2)
    a = anc[None, :, None, None, :]            # (1,A,1,1,2)
    lt = g - 0.5 * a
    rb = g + 0.5 * a
    return jnp.concatenate([lt, rb], axis=-1)  # (B,A,H,W,4)


def reference_on_activated_anchors(anc_flat, bboxes, grid, iou, A_, H_, W_):
    # TODO(synk): ReferenceOnActivatedAnchors source was not provided. This is a
    # deterministic static-shape YOLO-style re-implementation: positives = all A
    # anchors at the grid cell nearest each GT center; negatives = the M anchors
    # with lowest max-IoU (instead of random sampling below neg_thresh).
    Bb, N, _ = bboxes.shape
    HW_ = H_ * W_
    AHW_ = A_ * HW_
    centers = (bboxes[..., :2] + bboxes[..., 2:4]) / 2.0                # (B,N,2)
    grid_flat = grid.reshape(Bb, HW_, 2)
    dist = jnp.sum(jnp.abs(centers[:, :, None, :] - grid_flat[:, None, :, :]), axis=-1)
    cell = jnp.argmin(dist, axis=-1)                                    # (B,N)
    a_ix = jnp.arange(A_)
    anc_local = a_ix[None, None, :] * HW_ + cell[:, :, None]            # (B,N,A)
    b_ix = jnp.arange(Bb)[:, None, None]
    n_ix = jnp.arange(N)[None, :, None]
    pos_idx = (b_ix * AHW_ + anc_local).reshape(-1)                     # (M,)
    gt_conf = iou[b_ix, n_ix, anc_local].reshape(-1)                    # (M,)
    gt_class = jnp.broadcast_to(bboxes[..., 4][:, :, None], (Bb, N, A_)).reshape(-1).astype(jnp.int32)
    bb = jnp.broadcast_to(bboxes[..., :4][:, :, None, :], (Bb, N, A_, 4))
    ac = anc_flat[b_ix, anc_local]                                      # (B,N,A,4)
    xy = (bb[..., :2] + bb[..., 2:4] - ac[..., :2] - ac[..., 2:4]) / 2.0
    wh = jnp.log((bb[..., 2:4] - bb[..., :2]) / (ac[..., 2:4] - ac[..., :2]))
    gt_offsets = jnp.concatenate([xy, wh], axis=-1).reshape(-1, 4)      # (M,4)
    M = pos_idx.shape[0]
    max_iou_per_anc = jnp.max(iou, axis=1).reshape(-1)                  # (B*AHW,)
    _, neg_idx = jax.lax.top_k(-max_iou_per_anc, M)
    return pos_idx, neg_idx, gt_conf, gt_offsets, gt_class


def init_params(key):
    ks = jax.random.split(key, 6)
    scale = 0.05
    return {
        # backbone stand-in (MobileNetV2 FeatureExtractor replaced)
        "wf": scale * jax.random.normal(ks[0], (K_IN, IN_DIM), jnp.float32),
        "bf": jnp.zeros((IN_DIM,), jnp.float32),
        # PredictionNetwork 1x1 convs (weights stored (in, out))
        "w1": scale * jax.random.normal(ks[1], (IN_DIM, HIDDEN), jnp.float32),
        "b1": scale * jax.random.normal(ks[2], (HIDDEN,), jnp.float32),
        "w2": scale * jax.random.normal(ks[3], (HIDDEN, DOUT), jnp.float32),
        "b2": scale * jax.random.normal(ks[4], (DOUT,), jnp.float32),
    }


def single_stage_detector_forward(images, bboxes, params):
    """Training-time forward pass; returns total_loss (scalar)."""
    batch = images.shape[0]

    # ---- FeatureExtractor stand-in (deterministic patch embedding) ----
    # TODO(synk): real FeatureExtractor is a MobileNetV2 backbone; replaced by a
    # deterministic patch-flatten + linear projection producing (B, IN_DIM, 7, 7).
    x = jnp.transpose(images, (0, 2, 3, 1))                              # NCHW -> NHWC
    x = x.reshape(batch, H, PATCH, W, PATCH, 3).transpose(0, 1, 3, 2, 4, 5)
    x = x.reshape(batch * HW, K_IN)
    x_pad = jnp.zeros((M_ROWS_PAD, K_IN), jnp.float32).at[:batch * HW].set(x)
    x_pad = x_pad.astype(jnp.bfloat16)

    # pad head output channels 65 -> 128 (zero columns), cast matmul weights to bf16
    wf = params["wf"].astype(jnp.bfloat16)
    w1 = params["w1"].astype(jnp.bfloat16)
    w2p = jnp.pad(params["w2"], ((0, 0), (0, DOUT_PAD - DOUT))).astype(jnp.bfloat16)
    bf = params["bf"].reshape(1, -1)
    b1 = params["b1"].reshape(1, -1)
    b2p = jnp.pad(params["b2"], (0, DOUT_PAD - DOUT)).reshape(1, -1)

    # ---- fused backbone-projection + PredictionNetwork head (one pallas_call) ----
    Y_full = pallas_fused_head(x_pad, wf, bf, w1, b1, w2p, b2p)          # (128, 128)
    Y_rows = Y_full[:batch * HW]                                         # (B*H*W, 128) NHWC rows

    # ---- anchors & IoU (one pallas_call, 2 lane-dense input refs) ----
    grid = generate_grid(batch)                                          # (B,H,W,2)
    anchors = generate_anchor(jnp.asarray(ANCHOR_LIST), grid)            # (B,A,H,W,4)
    anc_flat = anchors.reshape(batch, AHW, 4)
    anc_cm = jnp.transpose(
        jnp.pad(anc_flat, ((0, 0), (0, AHW_PAD - AHW), (0, 0))), (2, 0, 1))  # (4,B,512)
    iou_pad = pallas_iou(anc_cm, bboxes)                                 # (B,N,512)
    iou = iou_pad[:, :, :AHW]                                            # (B,N,441)

    pos_idx, neg_idx, _gt_conf, gt_offsets, gt_class = reference_on_activated_anchors(
        anc_flat, bboxes, grid, iou, A, H, W)
    M = pos_idx.shape[0]

    # ---- extract predictions directly from NHWC head rows (no transpose plumbing) ----
    # flattened anchor index = b*A*H*W + a*H*W + h*W + w  -> (row = b*HW + hw, channel a*5+d)
    def _decompose(idx):
        b = idx // AHW
        rem = idx % AHW
        a = rem // HW
        hw = rem % HW
        return b * HW + hw, a

    row_pos, a_pos = _decompose(pos_idx)
    row_neg, a_neg = _decompose(neg_idx)
    pos_ch = a_pos[:, None] * 5 + jnp.arange(5)[None, :]                 # (M,5)
    pos_data = Y_rows[row_pos[:, None], pos_ch]                          # (M,5)
    neg_conf = Y_rows[row_neg, a_neg * 5][:, None]                       # (M,1)
    conf_scores = jnp.concatenate([pos_data[:, :1], neg_conf], axis=0)   # (2M,1)
    offsets = pos_data[:, 1:5]                                           # (M,4)
    class_scores = jnp.take(Y_rows, row_pos, axis=0)[:, 5 * A:5 * A + NUM_CLASSES]  # (M,C)

    # ---- losses (tiny reductions; plain JAX so XLA fuses them, no extra launches) ----
    # ConfScoreRegression: target = [ones(M); zeros(M)], sum-sq / (2M)
    conf_target = jnp.concatenate([jnp.ones((M, 1), jnp.float32),
                                   jnp.zeros((M, 1), jnp.float32)], axis=0)
    conf_loss = jnp.sum((conf_scores - conf_target) ** 2) / (2.0 * M)
    # BboxRegression: sum-sq / M
    reg_loss = jnp.sum((offsets - gt_offsets) ** 2) / float(M)
    # ObjectClassification: per-image-averaged cross entropy
    # TODO(synk): ObjectClassification source not provided; implemented as mean over
    # images of (mean cross-entropy over that image's positive anchors).
    lse = jax.scipy.special.logsumexp(class_scores, axis=-1)             # (M,)
    tgt = jnp.take_along_axis(class_scores, gt_class[:, None], axis=-1)[:, 0]
    ce = lse - tgt                                                       # (M,)
    cls_loss = 0.0
    for i in range(batch):
        m = ((pos_idx >= i * AHW) & (pos_idx < (i + 1) * AHW)).astype(jnp.float32)
        cls_loss = cls_loss + jnp.sum(ce * m) / jnp.maximum(jnp.sum(m), 1.0)
    cls_loss = cls_loss / batch

    w_conf = w_reg = w_cls = 1.0
    return w_conf * conf_loss + w_reg * reg_loss + w_cls * cls_loss


# ------------------------------ main -------------------------------------------
if __name__ == "__main__":
    key = jax.random.PRNGKey(0)
    k_img, k_par = jax.random.split(key)

    images = jax.random.normal(k_img, (B, 3, H * PATCH, W * PATCH), jnp.float32)  # (2,3,56,56)
    # GT boxes (x_tl, y_tl, x_br, y_br, class) in 7x7 activation-map coordinates.
    bboxes = jnp.asarray([
        [[0.5, 0.5, 2.5, 3.0, 3.0],
         [3.2, 2.1, 5.0, 4.4, 7.0],
         [1.0, 4.0, 3.2, 6.5, 1.0]],
        [[2.0, 1.0, 4.5, 3.5, 5.0],
         [0.2, 0.3, 1.9, 2.2, 12.0],
         [4.0, 4.0, 6.8, 6.9, 0.0]],
    ], dtype=jnp.float32)                                                # (2,3,5)

    params = init_params(k_par)

    total_loss = jax.jit(single_stage_detector_forward)(images, bboxes, params)
    total_loss = jax.block_until_ready(total_loss)
    assert np.isfinite(float(total_loss)), "loss is not finite"
    print("KERNEL_OK")
</pallas_src>

<mosaic_0001>
module attributes {stable_mosaic.version = 11 : i64} {
  func.func @fused_head_kernel(%arg0: memref<128x192xbf16, #tpu.memory_space<vmem>>, %arg1: memref<192x128xbf16, #tpu.memory_space<vmem>>, %arg2: memref<1x128xf32, #tpu.memory_space<vmem>>, %arg3: memref<128x128xbf16, #tpu.memory_space<vmem>>, %arg4: memref<1x128xf32, #tpu.memory_space<vmem>>, %arg5: memref<128x128xbf16, #tpu.memory_space<vmem>>, %arg6: memref<1x128xf32, #tpu.memory_space<vmem>>, %arg7: memref<128x128xf32, #tpu.memory_space<vmem>>) attributes {dimension_semantics = [], scalar_prefetch = 0 : i64, scratch_operands = 0 : i64, tpu.core_type = #tpu.core_type<tc>} {
    %c0 = arith.constant 0 : index
    %c0_0 = arith.constant 0 : index
    %0 = vector.load %arg0[%c0, %c0_0] : memref<128x192xbf16, #tpu.memory_space<vmem>>, vector<128x192xbf16>
    %c0_1 = arith.constant 0 : index
    %c0_2 = arith.constant 0 : index
    %1 = vector.load %arg1[%c0_1, %c0_2] : memref<192x128xbf16, #tpu.memory_space<vmem>>, vector<192x128xbf16>
    %cst = arith.constant dense<0.000000e+00> : vector<128x128xf32>
    %2 = tpu.matmul %0, %1, %cst {dimension_numbers = #tpu.dot_dimension_numbers<[1], [0], [0], [1], [0, 0, 1, 1], [], []>} : vector<128x192xbf16>, vector<192x128xbf16>, vector<128x128xf32> -> vector<128x128xf32>
    %c0_3 = arith.constant 0 : index
    %c0_4 = arith.constant 0 : index
    %3 = vector.load %arg2[%c0_3, %c0_4] : memref<1x128xf32, #tpu.memory_space<vmem>>, vector<1x128xf32>
    %4 = vector.broadcast %3 : vector<1x128xf32> to vector<128x128xf32>
    %5 = arith.addf %2, %4 : vector<128x128xf32>
    %cst_5 = arith.constant 0.000000e+00 : f32
    %6 = vector.broadcast %cst_5 : f32 to vector<128x128xf32>
    %7 = arith.maximumf %5, %6 : vector<128x128xf32>
    %8 = arith.truncf %7 : vector<128x128xf32> to vector<128x128xbf16>
    %c0_6 = arith.constant 0 : index
    %c0_7 = arith.constant 0 : index
    %9 = vector.load %arg3[%c0_6, %c0_7] : memref<128x128xbf16, #tpu.memory_space<vmem>>, vector<128x128xbf16>
    %cst_8 = arith.constant dense<0.000000e+00> : vector<128x128xf32>
    %10 = tpu.matmul %8, %9, %cst_8 {dimension_numbers = #tpu.dot_dimension_numbers<[1], [0], [0], [1], [0, 0, 1, 1], [], []>} : vector<128x128xbf16>, vector<128x128xbf16>, vector<128x128xf32> -> vector<128x128xf32>
    %c0_9 = arith.constant 0 : index
    %c0_10 = arith.constant 0 : index
    %11 = vector.load %arg4[%c0_9, %c0_10] : memref<1x128xf32, #tpu.memory_space<vmem>>, vector<1x128xf32>
    %12 = vector.broadcast %11 : vector<1x128xf32> to vector<128x128xf32>
    %13 = arith.addf %10, %12 : vector<128x128xf32>
    %cst_11 = arith.constant 0.000000e+00 : f32
    %14 = vector.broadcast %cst_11 : f32 to vector<128x128xf32>
    %15 = arith.cmpf ogt, %13, %14 : vector<128x128xf32>
    %cst_12 = arith.constant 0.00999999977 : f32
    %16 = vector.broadcast %cst_12 : f32 to vector<128x128xf32>
    %17 = arith.mulf %16, %13 : vector<128x128xf32>
    %18 = arith.select %15, %13, %17 : vector<128x128xi1>, vector<128x128xf32>
    %19 = arith.truncf %18 : vector<128x128xf32> to vector<128x128xbf16>
    %c0_13 = arith.constant 0 : index
    %c0_14 = arith.constant 0 : index
    %20 = vector.load %arg5[%c0_13, %c0_14] : memref<128x128xbf16, #tpu.memory_space<vmem>>, vector<128x128xbf16>
    %cst_15 = arith.constant dense<0.000000e+00> : vector<128x128xf32>
    %21 = tpu.matmul %19, %20, %cst_15 {dimension_numbers = #tpu.dot_dimension_numbers<[1], [0], [0], [1], [0, 0, 1, 1], [], []>} : vector<128x128xbf16>, vector<128x128xbf16>, vector<128x128xf32> -> vector<128x128xf32>
    %c0_16 = arith.constant 0 : index
    %c0_17 = arith.constant 0 : index
    %22 = vector.load %arg6[%c0_16, %c0_17] : memref<1x128xf32, #tpu.memory_space<vmem>>, vector<1x128xf32>
    %23 = vector.broadcast %22 : vector<1x128xf32> to vector<128x128xf32>
    %24 = arith.addf %21, %23 : vector<128x128xf32>
    %25 = tpu.iota {dimensions = array<i32: 1>} : vector<128x128xi32>
    %c5_i32 = arith.constant 5 : i32
    %c0_i32 = arith.constant 0 : i32
    %26 = arith.cmpi eq, %c5_i32, %c0_i32 : i32
    %c1_i32 = arith.constant 1 : i32
    %27 = arith.select %26, %c1_i32, %c5_i32 : i32
    %28 = vector.broadcast %27 : i32 to vector<128x128xi32>
    %29 = arith.remsi %25, %28 : vector<128x128xi32>
    %c0_i32_18 = arith.constant 0 : i32
    %30 = vector.broadcast %c0_i32_18 : i32 to vector<128x128xi32>
    %31 = arith.cmpi ne, %29, %30 : vector<128x128xi32>
    %c0_i32_19 = arith.constant 0 : i32
    %32 = vector.broadcast %c0_i32_19 : i32 to vector<128x128xi32>
    %33 = arith.cmpi slt, %29, %32 : vector<128x128xi32>
    %c0_i32_20 = arith.constant 0 : i32
    %34 = arith.cmpi slt, %27, %c0_i32_20 : i32
    %35 = vector.broadcast %34 : i1 to vector<128x128xi1>
    %36 = vector.broadcast %35 : vector<128x128xi1> to vector<128x128xi1>
    %37 = arith.xori %33, %36 : vector<128x128xi1>
    %38 = arith.andi %37, %31 : vector<128x128xi1>
    %39 = vector.broadcast %27 : i32 to vector<128x128xi32>
    %40 = arith.addi %29, %39 : vector<128x128xi32>
    %41 = arith.select %38, %40, %29 : vector<128x128xi1>, vector<128x128xi32>
    %c45_i32 = arith.constant 45 : i32
    %42 = vector.broadcast %c45_i32 : i32 to vector<128x128xi32>
    %43 = arith.cmpi slt, %25, %42 : vector<128x128xi32>
    %c3_i32 = arith.constant 3 : i32
    %44 = vector.broadcast %c3_i32 : i32 to vector<128x128xi32>
    %45 = arith.cmpi slt, %41, %44 : vector<128x128xi32>
    %46 = arith.andi %43, %45 : vector<128x128xi1>
    %c1_i32_21 = arith.constant 1 : i32
    %47 = vector.broadcast %c1_i32_21 : i32 to vector<128x128xi32>
    %48 = arith.cmpi eq, %41, %47 : vector<128x128xi32>
    %c2_i32 = arith.constant 2 : i32
    %49 = vector.broadcast %c2_i32 : i32 to vector<128x128xi32>
    %50 = arith.cmpi eq, %41, %49 : vector<128x128xi32>
    %51 = arith.ori %48, %50 : vector<128x128xi1>
    %52 = arith.andi %43, %51 : vector<128x128xi1>
    %cst_22 = arith.constant 0.000000e+00 : f32
    %53 = vector.broadcast %cst_22 : f32 to vector<128x128xf32>
    %54 = arith.select %46, %24, %53 : vector<128x128xi1>, vector<128x128xf32>
    %cst_23 = arith.constant 0.000000e+00 : f32
    %55 = vector.broadcast %cst_23 : f32 to vector<128x128xf32>
    %56 = arith.subf %55, %54 : vector<128x128xf32>
    %57 = math.exp %56 : vector<128x128xf32>
    %cst_24 = arith.constant 1.000000e+00 : f32
    %58 = vector.broadcast %cst_24 : f32 to vector<128x128xf32>
    %59 = arith.addf %58, %57 : vector<128x128xf32>
    %cst_25 = arith.constant 1.000000e+00 : f32
    %60 = vector.broadcast %cst_25 : f32 to vector<128x128xf32>
    %61 = arith.divf %60, %59 : vector<128x128xf32>
    %62 = arith.select %46, %61, %24 : vector<128x128xi1>, vector<128x128xf32>
    %cst_26 = arith.constant 5.000000e-01 : f32
    %63 = vector.broadcast %cst_26 : f32 to vector<128x128xf32>
    %64 = arith.subf %62, %63 : vector<128x128xf32>
    %65 = arith.select %52, %64, %62 : vector<128x128xi1>, vector<128x128xf32>
    %c0_27 = arith.constant 0 : index
    %c0_28 = arith.constant 0 : index
    %66 = vector.load %arg7[%c0_27, %c0_28] : memref<128x128xf32, #tpu.memory_space<vmem>>, vector<128x128xf32>
    tpu.vector_store %arg7[%c0_27, %c0_28], %65 {strides = array<i32>} : memref<128x128xf32, #tpu.memory_space<vmem>>, vector<128x128xf32>,
    return
  }
}

module attributes {stable_mosaic.version = 11 : i64} {
  func.func @iou_kernel(%arg0: memref<4x2x512xf32, #tpu.memory_space<vmem>>, %arg1: memref<2x3x5xf32, #tpu.memory_space<vmem>>, %arg2: memref<2x3x512xf32, #tpu.memory_space<vmem>>) attributes {dimension_semantics = [], scalar_prefetch = 0 : i64, scratch_operands = 0 : i64, tpu.core_type = #tpu.core_type<tc>} {
    %c0 = arith.constant 0 : index
    %c0_0 = arith.constant 0 : index
    %c0_1 = arith.constant 0 : index
    %0 = vector.load %arg0[%c0, %c0_0, %c0_1] : memref<4x2x512xf32, #tpu.memory_space<vmem>>, vector<4x2x512xf32>
    %c0_2 = arith.constant 0 : index
    %c0_3 = arith.constant 0 : index
    %c0_4 = arith.constant 0 : index
    %1 = vector.load %arg1[%c0_2, %c0_3, %c0_4] : memref<2x3x5xf32, #tpu.memory_space<vmem>>, vector<2x3x5xf32>
    %2 = vector.extract_strided_slice %0 {offsets = [0, 0, 0], sizes = [1, 2, 512], strides = [1, 1, 1]} : vector<4x2x512xf32> to vector<1x2x512xf32>
    %3 = vector.shape_cast %2 : vector<1x2x512xf32> to vector<2x512xf32>
    %4 = vector.shape_cast %3 : vector<2x512xf32> to vector<2x1x512xf32>
    %5 = vector.extract_strided_slice %0 {offsets = [1, 0, 0], sizes = [1, 2, 512], strides = [1, 1, 1]} : vector<4x2x512xf32> to vector<1x2x512xf32>
    %6 = vector.shape_cast %5 : vector<1x2x512xf32> to vector<2x512xf32>
    %7 = vector.shape_cast %6 : vector<2x512xf32> to vector<2x1x512xf32>
    %8 = vector.extract_strided_slice %0 {offsets = [2, 0, 0], sizes = [1, 2, 512], strides = [1, 1, 1]} : vector<4x2x512xf32> to vector<1x2x512xf32>
    %9 = vector.shape_cast %8 : vector<1x2x512xf32> to vector<2x512xf32>
    %10 = vector.shape_cast %9 : vector<2x512xf32> to vector<2x1x512xf32>
    %11 = vector.extract_strided_slice %0 {offsets = [3, 0, 0], sizes = [1, 2, 512], strides = [1, 1, 1]} : vector<4x2x512xf32> to vector<1x2x512xf32>
    %12 = vector.shape_cast %11 : vector<1x2x512xf32> to vector<2x512xf32>
    %13 = vector.shape_cast %12 : vector<2x512xf32> to vector<2x1x512xf32>
    %14 = vector.extract_strided_slice %1 {offsets = [0, 0, 0], sizes = [2, 3, 1], strides = [1, 1, 1]} : vector<2x3x5xf32> to vector<2x3x1xf32>
    %15 = vector.extract_strided_slice %1 {offsets = [0, 0, 1], sizes = [2, 3, 1], strides = [1, 1, 1]} : vector<2x3x5xf32> to vector<2x3x1xf32>
    %16 = vector.extract_strided_slice %1 {offsets = [0, 0, 2], sizes = [2, 3, 1], strides = [1, 1, 1]} : vector<2x3x5xf32> to vector<2x3x1xf32>
    %17 = vector.extract_strided_slice %1 {offsets = [0, 0, 3], sizes = [2, 3, 1], strides = [1, 1, 1]} : vector<2x3x5xf32> to vector<2x3x1xf32>
    %18 = vector.broadcast %4 : vector<2x1x512xf32> to vector<2x3x512xf32>
    %19 = vector.broadcast %14 : vector<2x3x1xf32> to vector<2x3x512xf32>
    %20 = arith.maximumf %18, %19 : vector<2x3x512xf32>
    %21 = vector.broadcast %7 : vector<2x1x512xf32> to vector<2x3x512xf32>
    %22 = vector.broadcast %15 : vector<2x3x1xf32> to vector<2x3x512xf32>
    %23 = arith.maximumf %21, %22 : vector<2x3x512xf32>
    %24 = vector.broadcast %10 : vector<2x1x512xf32> to vector<2x3x512xf32>
    %25 = vector.broadcast %16 : vector<2x3x1xf32> to vector<2x3x512xf32>
    %26 = arith.minimumf %24, %25 : vector<2x3x512xf32>
    %27 = vector.broadcast %13 : vector<2x1x512xf32> to vector<2x3x512xf32>
    %28 = vector.broadcast %17 : vector<2x3x1xf32> to vector<2x3x512xf32>
    %29 = arith.minimumf %27, %28 : vector<2x3x512xf32>
    %30 = arith.subf %26, %20 : vector<2x3x512xf32>
    %cst = arith.constant 0.000000e+00 : f32
    %31 = vector.broadcast %cst : f32 to vector<2x3x512xf32>
    %32 = arith.maximumf %30, %31 : vector<2x3x512xf32>
    %33 = arith.subf %29, %23 : vector<2x3x512xf32>
    %cst_5 = arith.constant 0.000000e+00 : f32
    %34 = vector.broadcast %cst_5 : f32 to vector<2x3x512xf32>
    %35 = arith.maximumf %33, %34 : vector<2x3x512xf32>
    %36 = arith.mulf %32, %35 : vector<2x3x512xf32>
    %37 = arith.subf %10, %4 : vector<2x1x512xf32>
    %38 = arith.subf %13, %7 : vector<2x1x512xf32>
    %39 = arith.mulf %37, %38 : vector<2x1x512xf32>
    %40 = arith.subf %16, %14 : vector<2x3x1xf32>
    %41 = arith.subf %17, %15 : vector<2x3x1xf32>
    %42 = arith.mulf %40, %41 : vector<2x3x1xf32>
    %43 = vector.broadcast %39 : vector<2x1x512xf32> to vector<2x3x512xf32>
    %44 = vector.broadcast %42 : vector<2x3x1xf32> to vector<2x3x512xf32>
    %45 = arith.addf %43, %44 : vector<2x3x512xf32>
    %46 = arith.subf %45, %36 : vector<2x3x512xf32>
    %cst_6 = arith.constant 9.99999993E-9 : f32
    %47 = vector.broadcast %cst_6 : f32 to vector<2x3x512xf32>
    %48 = arith.maximumf %46, %47 : vector<2x3x512xf32>
    %49 = arith.divf %36, %48 : vector<2x3x512xf32>
    %c0_7 = arith.constant 0 : index
    %c0_8 = arith.constant 0 : index
    %c0_9 = arith.constant 0 : index
    %50 = vector.load %arg2[%c0_7, %c0_8, %c0_9] : memref<2x3x512xf32, #tpu.memory_space<vmem>>, vector<2x3x512xf32>
    tpu.vector_store %arg2[%c0_7, %c0_8, %c0_9], %49 {strides = array<i32>} : memref<2x3x512xf32, #tpu.memory_space<vmem>>, vector<2x3x512xf32>,
    return
  }
}

</mosaic_0001>

<llo_original>
// kernel: single_stage_detector_forward.2
$region0: #{single_stage_detector_forward.2}
  #allocation0 [shape = 'u32[]', space=smem, size = 0x4, offset = 0x4, fixed_abs, tag = 'smem constant byte address 0x4 - core index']
  #allocation1 [shape = 'u32[144,128]{1,0:T(1,128)}', space=vmem, size = 0x12000, scoped, tag = 'internal scratch']
  %s0 = inlined_call_operand.vmem [shape: bf16[128,192], index: 0, kind: input, shape index: {}]
  %s1 = inlined_call_operand.vmem [shape: bf16[192,128], index: 1, kind: input, shape index: {}]
  %s2 = inlined_call_operand.vmem [shape: f32[1,128], index: 2, kind: input, shape index: {}]
  %s3 = inlined_call_operand.vmem [shape: bf16[128,128], index: 3, kind: input, shape index: {}]
  %s4 = inlined_call_operand.vmem [shape: f32[1,128], index: 4, kind: input, shape index: {}]
  %s5 = inlined_call_operand.vmem [shape: bf16[128,128], index: 5, kind: input, shape index: {}]
  %s6 = inlined_call_operand.vmem [shape: f32[1,128], index: 6, kind: input, shape index: {}]
  %s7 = inlined_call_operand.vmem [shape: f32[128,128], index: 7, kind: output, shape index: {}]
  %s8 = sld [smem:[#allocation0]]
  $region38: #{single_stage_detector_forward.2} parent=0
    _
  %s10 = ssub.s32 1, %s8
  %s11 = scalar_select 0, %s10, %s8
  // Predicated region
  $region2: #{single_stage_detector_forward.2} parent=0 // pred_check
    _
  $region3: #{single_stage_detector_forward.2} parent=0 // pred_check_branch
    %13 = sbr.rel (0) target = $region5
  $region4: #{single_stage_detector_forward.2} parent=0 // pred_region
    _
  $region5: #{single_stage_detector_forward.2} parent=0 // pred_fallthru
    _
  // Predicated region
  $region6: #{single_stage_detector_forward.2} parent=0 // pred_check
    _
  $region7: #{single_stage_detector_forward.2} parent=0 // pred_check_branch
    %15 = sbr.rel (0) target = $region9
  $region8: #{single_stage_detector_forward.2} parent=0 // pred_region
    _
  $region9: #{single_stage_detector_forward.2} parent=0 // pred_fallthru
    _
  // Predicated region
  $region10: #{single_stage_detector_forward.2} parent=0 // pred_check
    _
  $region11: #{single_stage_detector_forward.2} parent=0 // pred_check_branch
    %17 = sbr.rel (0) target = $region13
  $region12: #{single_stage_detector_forward.2} parent=0 // pred_region
    _
  $region13: #{single_stage_detector_forward.2} parent=0 // pred_fallthru
    _
  // Predicated region
  $region14: #{single_stage_detector_forward.2} parent=0 // pred_check
    _
  $region15: #{single_stage_detector_forward.2} parent=0 // pred_check_branch
    %19 = sbr.rel (0) target = $region17
  $region16: #{single_stage_detector_forward.2} parent=0 // pred_region
    _
  $region17: #{single_stage_detector_forward.2} parent=0 // pred_fallthru
    _
  // Predicated region
  $region18: #{single_stage_detector_forward.2} parent=0 // pred_check
    _
  $region19: #{single_stage_detector_forward.2} parent=0 // pred_check_branch
    %21 = sbr.rel (0) target = $region21
  $region20: #{single_stage_detector_forward.2} parent=0 // pred_region
    _
  $region21: #{single_stage_detector_forward.2} parent=0 // pred_fallthru
    _
  // Predicated region
  $region22: #{single_stage_detector_forward.2} parent=0 // pred_check
    _
  $region23: #{single_stage_detector_forward.2} parent=0 // pred_check_branch
    %23 = sbr.rel (0) target = $region25
  $region24: #{single_stage_detector_forward.2} parent=0 // pred_region
    _
  $region25: #{single_stage_detector_forward.2} parent=0 // pred_fallthru
    _
  // Predicated region
  $region26: #{single_stage_detector_forward.2} parent=0 // pred_check
    _
  $region27: #{single_stage_detector_forward.2} parent=0 // pred_check_branch
    %25 = sbr.rel (0) target = $region29
  $region28: #{single_stage_detector_forward.2} parent=0 // pred_region
    _
  $region29: #{single_stage_detector_forward.2} parent=0 // pred_fallthru
    _
  %v27 = vld [vmem:[%s0] sm:$0xff]
  %v28 = vld [vmem:[%s0 + $0x8] sm:$0xff]
  %v29 = vld [vmem:[%s0 + $0x10] sm:$0xff]
  %v30 = vld [vmem:[%s0 + $0x18] sm:$0xff]
  %v31 = vld [vmem:[%s0 + $0x20] sm:$0xff]
  %v32 = vld [vmem:[%s0 + $0x28] sm:$0xff]
  %v33 = vld [vmem:[%s0 + $0x30] sm:$0xff]
  %v34 = vld [vmem:[%s0 + $0x38] sm:$0xff]
  %v35 = vld [vmem:[%s0 + $0x40] sm:$0xff]
  %v36 = vld [vmem:[%s0 + $0x48] sm:$0xff]
  %v37 = vld [vmem:[%s0 + $0x50] sm:$0xff]
  %v38 = vld [vmem:[%s0 + $0x58] sm:$0xff]
  %v39 = vld [vmem:[%s0 + $0x60] sm:$0xff]
  %v40 = vld [vmem:[%s0 + $0x68] sm:$0xff]
  %v41 = vld [vmem:[%s0 + $0x70] sm:$0xff]
  %v42 = vld [vmem:[%s0 + $0x78] sm:$0xff]
  %v43 = vld [vmem:[%s1] sm:$0xf]
  %v44 = vld [vmem:[%s1 + $0x4] sm:$0xf]
  %v45 = vld [vmem:[%s1 + $0x8] sm:$0xf]
  %v46 = vld [vmem:[%s1 + $0xc] sm:$0xf]
  %v47 = vld [vmem:[%s1 + $0x10] sm:$0xf]
  %v48 = vld [vmem:[%s1 + $0x14] sm:$0xf]
  %v49 = vld [vmem:[%s1 + $0x18] sm:$0xf]
  %v50 = vld [vmem:[%s1 + $0x1c] sm:$0xf]
  %v51 = vld [vmem:[%s1 + $0x20] sm:$0xf]
  %v52 = vld [vmem:[%s1 + $0x24] sm:$0xf]
  %v53 = vld [vmem:[%s1 + $0x28] sm:$0xf]
  %v54 = vld [vmem:[%s1 + $0x2c] sm:$0xf]
  %v55 = vld [vmem:[%s1 + $0x30] sm:$0xf]
  %v56 = vld [vmem:[%s1 + $0x34] sm:$0xf]
  %v57 = vld [vmem:[%s1 + $0x38] sm:$0xf]
  %v58 = vld [vmem:[%s1 + $0x3c] sm:$0xf]
  %v59 = vld [vmem:[%s1 + $0x40] sm:$0xf]
  %v60 = vld [vmem:[%s1 + $0x44] sm:$0xf]
  %v61 = vld [vmem:[%s1 + $0x48] sm:$0xf]
  %v62 = vld [vmem:[%s1 + $0x4c] sm:$0xf]
  %v63 = vld [vmem:[%s1 + $0x50] sm:$0xf]
  %v64 = vld [vmem:[%s1 + $0x54] sm:$0xf]
  %v65 = vld [vmem:[%s1 + $0x58] sm:$0xf]
  %v66 = vld [vmem:[%s1 + $0x5c] sm:$0xf]
  %v67 = vld [vmem:[%s2] sm:$0x1]
  %v69 = vlaneseq
  %v70 = vshrl.u32 %v69, 7
  %v71 = vsub.s32 0, %v70
  %v72 = vrot.slane %v67, %v71
  %v90 = vunpack.c.l.b16 %v27
  %v91 = vunpack.c.h.b16 %v27
  %v92 = vunpack.c.l.b16 %v28
  %v93 = vunpack.c.h.b16 %v28
  %v94 = vunpack.c.l.b16 %v29
  %v95 = vunpack.c.h.b16 %v29
  %v96 = vunpack.c.l.b16 %v30
  %v97 = vunpack.c.h.b16 %v30
  %v98 = vunpack.c.l.b16 %v31
  %v99 = vunpack.c.h.b16 %v31
  %v100 = vunpack.c.l.b16 %v32
  %v101 = vunpack.c.h.b16 %v32
  %v102 = vunpack.c.l.b16 %v33
  %v103 = vunpack.c.h.b16 %v33
  %v104 = vunpack.c.l.b16 %v34
  %v105 = vunpack.c.h.b16 %v34
  %v106 = vunpack.c.l.b16 %v35
  %v107 = vunpack.c.h.b16 %v35
  %v108 = vunpack.c.l.b16 %v36
  %v109 = vunpack.c.h.b16 %v36
  %v110 = vunpack.c.l.b16 %v37
  %v111 = vunpack.c.h.b16 %v37
  %v112 = vunpack.c.l.b16 %v38
  %v113 = vunpack.c.h.b16 %v38
  %v114 = vunpack.c.l.b16 %v39
  %v115 = vunpack.c.h.b16 %v39
  %v116 = vunpack.c.l.b16 %v40
  %v117 = vunpack.c.h.b16 %v40
  %v118 = vunpack.c.l.b16 %v41
  %v119 = vunpack.c.h.b16 %v41
  %v120 = vunpack.c.l.b16 %v42
  %v121 = vunpack.c.h.b16 %v42
  %v122 = vpack.c.b16 %v92, %v90
  %v123 = vpack.c.b16 %v93, %v91
  %v124 = vpack.c.b16 %v96, %v94
  %v125 = vpack.c.b16 %v97, %v95
  %v126 = vpack.c.b16 %v100, %v98
  %v127 = vpack.c.b16 %v101, %v99
  %v128 = vpack.c.b16 %v104, %v102
  %v129 = vpack.c.b16 %v105, %v103
  %v130 = vpack.c.b16 %v108, %v106
  %v131 = vpack.c.b16 %v109, %v107
  %v132 = vpack.c.b16 %v112, %v110
  %v133 = vpack.c.b16 %v113, %v111
  %v134 = vpack.c.b16 %v116, %v114
  %v135 = vpack.c.b16 %v117, %v115
  %v136 = vpack.c.b16 %v120, %v118
  %v137 = vpack.c.b16 %v121, %v119
  %v170 = vunpack.c.l.b16 %v43
  %v171 = vunpack.c.l.b16 %v44
  %v172 = vunpack.c.l.b16 %v45
  %v173 = vunpack.c.l.b16 %v46
  %v174 = vunpack.c.l.b16 %v47
  %v175 = vunpack.c.l.b16 %v48
  %v176 = vunpack.c.l.b16 %v49
  %v177 = vunpack.c.l.b16 %v50
  %v178 = vunpack.c.l.b16 %v51
  %v179 = vunpack.c.l.b16 %v52
  %v180 = vunpack.c.l.b16 %v53
  %v181 = vunpack.c.l.b16 %v54
  %v182 = vunpack.c.l.b16 %v55
  %v183 = vunpack.c.l.b16 %v56
  %v184 = vunpack.c.l.b16 %v57
  %v185 = vunpack.c.l.b16 %v58
  %v186 = vunpack.c.l.b16 %v59
  %v187 = vunpack.c.l.b16 %v60
  %v188 = vunpack.c.l.b16 %v61
  %v189 = vunpack.c.l.b16 %v62
  %v190 = vunpack.c.l.b16 %v63
  %v191 = vunpack.c.l.b16 %v64
  %v192 = vunpack.c.l.b16 %v65
  %v193 = vunpack.c.l.b16 %v66
  %v194 = vpack.c.b16 %v171, %v170
  %v195 = vpack.c.b16 %v173, %v172
  %v196 = vpack.c.b16 %v175, %v174
  %v197 = vpack.c.b16 %v177, %v176
  %v198 = vpack.c.b16 %v179, %v178
  %v199 = vpack.c.b16 %v181, %v180
  %v200 = vpack.c.b16 %v183, %v182
  %v201 = vpack.c.b16 %v185, %v184
  %v202 = vpack.c.b16 %v187, %v186
  %v203 = vpack.c.b16 %v189, %v188
  %v204 = vpack.c.b16 %v191, %v190
  %v205 = vpack.c.b16 %v193, %v192
  %vm218 = vcmask 523264
  %v220 = vsel %vm218, %v123, 0
  %v223 = vsel %vm218, %v125, 0
  %v226 = vsel %vm218, %v127, 0
  %v229 = vsel %vm218, %v129, 0
  %v232 = vsel %vm218, %v131, 0
  %v235 = vsel %vm218, %v133, 0
  %v238 = vsel %vm218, %v135, 0
  %v241 = vsel %vm218, %v137, 0
  %243 = vmatprep.subr.bf16.mxu0 0
  %244 = vmatpush1.bf16.msra.mxu0 %v194
  %245 = vmatprep.subr.bf16.mxu0 0
  %246 = vmatpush1.bf16.msra.mxu0 %v195
  %247 = vmatprep.subr.bf16.mxu0 0
  %248 = vmatpush1.bf16.msra.mxu0 %v196
  %249 = vmatprep.subr.bf16.mxu0 0
  %250 = vmatpush1.bf16.msra.mxu0 %v197
  %251 = vmatprep.subr.bf16.mxu0 0
  %252 = vmatpush1.bf16.msra.mxu0 %v198
  %253 = vmatprep.subr.bf16.mxu0 0
  %254 = vmatpush1.bf16.msra.mxu0 %v199
  %255 = vmatprep.subr.bf16.mxu0 0
  %256 = vmatpush1.bf16.msra.mxu0 %v200
  %257 = vmatprep.subr.bf16.mxu0 0
  %258 = vmatpush1.bf16.msra.mxu0 %v201
  %259 = vmatprep.subr.bf16.mxu0 0
  %260 = vmatpush1.bf16.msra.mxu0 %v202
  %261 = vmatprep.subr.bf16.mxu0 0
  %262 = vmatpush1.bf16.msra.mxu0 %v203
  %263 = vmatprep.subr.bf16.mxu0 0
  %264 = vmatpush1.bf16.msra.mxu0 %v204
  %265 = vmatprep.subr.bf16.mxu0 0
  %266 = vmatpush1.bf16.msra.mxu0 %v205
  %267 = vmatprep.subr.bf16.mxu0 0
  %268 = vmatpush1.bf16.msra.mxu0 0
  %269 = vmatprep.subr.bf16.mxu0 0
  %270 = vmatpush1.bf16.msra.mxu0 0
  %271 = vmatprep.subr.bf16.mxu0 0
  %272 = vmatpush1.bf16.msra.mxu0 0
  %273 = vmatprep.subr.bf16.mxu0 0
  %274 = vmatpush1.bf16.msra.mxu0 0
  %275 = vmatprep.mubr.bf16.mxu0 %v220
  %276 = vmatmul.mubr.bf16.gmra.mrb[0].mxu0 %v122
  %v277 = vpop.f32.mrb[0].mxu0
  %v278 = vadd.f32 %v72, %v277
  %v279 = vpop.f32.mrb[0].mxu0
  %v280 = vpop.f32.mrb[0].mxu0
  %v281 = vadd.f32 %v72, %v280
  %v282 = vpop.f32.mrb[0].mxu0
  %283 = vmatprep.mubr.bf16.mxu0 %v223
  %284 = vmatmul.mubr.bf16.gmra.mrb[0].mxu0 %v124
  %v285 = vpop.f32.mrb[0].mxu0
  %v286 = vadd.f32 %v72, %v285
  %v287 = vpop.f32.mrb[0].mxu0
  %v288 = vpop.f32.mrb[0].mxu0
  %v289 = vadd.f32 %v72, %v288
  %v290 = vpop.f32.mrb[0].mxu0
  %291 = vmatprep.mubr.bf16.mxu0 %v226
  %292 = vmatmul.mubr.bf16.gmra.mrb[0].mxu0 %v126
  %v293 = vpop.f32.mrb[0].mxu0
  %v294 = vadd.f32 %v72, %v293
  %v295 = vpop.f32.mrb[0].mxu0
  %v296 = vpop.f32.mrb[0].mxu0
  %v297 = vadd.f32 %v72, %v296
  %v298 = vpop.f32.mrb[0].mxu0
  %299 = vmatprep.mubr.bf16.mxu0 %v229
  %300 = vmatmul.mubr.bf16.gmra.mrb[0].mxu0 %v128
  %v301 = vpop.f32.mrb[0].mxu0
  %v302 = vadd.f32 %v72, %v301
  %v303 = vpop.f32.mrb[0].mxu0
  %v304 = vpop.f32.mrb[0].mxu0
  %v305 = vadd.f32 %v72, %v304
  %v306 = vpop.f32.mrb[0].mxu0
  %307 = vmatprep.mubr.bf16.mxu0 %v232
  %308 = vmatmul.mubr.bf16.gmra.mrb[0].mxu0 %v130
  %v309 = vpop.f32.mrb[0].mxu0
  %v310 = vadd.f32 %v72, %v309
  %v311 = vpop.f32.mrb[0].mxu0
  %v312 = vpop.f32.mrb[0].mxu0
  %v313 = vadd.f32 %v72, %v312
  %v314 = vpop.f32.mrb[0].mxu0
  %315 = vmatprep.mubr.bf16.mxu0 %v235
  %316 = vmatmul.mubr.bf16.gmra.mrb[0].mxu0 %v132
  %v317 = vpop.f32.mrb[0].mxu0
  %v318 = vadd.f32 %v72, %v317
  %v319 = vpop.f32.mrb[0].mxu0
  %v320 = vpop.f32.mrb[0].mxu0
  %v321 = vadd.f32 %v72, %v320
  %v322 = vpop.f32.mrb[0].mxu0
  %323 = vmatprep.mubr.bf16.mxu0 %v238
  %324 = vmatmul.mubr.bf16.gmra.mrb[0].mxu0 %v134
  %v325 = vpop.f32.mrb[0].mxu0
  %v326 = vadd.f32 %v72, %v325
  %v327 = vpop.f32.mrb[0].mxu0
  %v328 = vpop.f32.mrb[0].mxu0
  %v329 = vadd.f32 %v72, %v328
  %v330 = vpop.f32.mrb[0].mxu0
  %331 = vmatprep.mubr.bf16.mxu0 %v241
  %332 = vmatmul.mubr.bf16.gmra.mrb[0].mxu0 %v136
  %v333 = vpop.f32.mrb[0].mxu0
  %v334 = vadd.f32 %v72, %v333
  %v335 = vpop.f32.mrb[0].mxu0
  %v336 = vpop.f32.mrb[0].mxu0
  %v337 = vadd.f32 %v72, %v336
  %v338 = vpop.f32.mrb[0].mxu0
  %339 = vdwg.mxu0
  %v340 = vmax.f32 %v278, 0.0
  %v341 = vmax.f32 %v281, 0.0
  %v342 = vmax.f32 %v286, 0.0
  %v343 = vmax.f32 %v289, 0.0
  %v344 = vmax.f32 %v294, 0.0
  %v345 = vmax.f32 %v297, 0.0
  %v346 = vmax.f32 %v302, 0.0
  %v347 = vmax.f32 %v305, 0.0
  %v348 = vmax.f32 %v310, 0.0
  %v349 = vmax.f32 %v313, 0.0
  %v350 = vmax.f32 %v318, 0.0
  %v351 = vmax.f32 %v321, 0.0
  %v352 = vmax.f32 %v326, 0.0
  %v353 = vmax.f32 %v329, 0.0
  %v354 = vmax.f32 %v334, 0.0
  %v355 = vmax.f32 %v337, 0.0
  %v356 = vpack.c.bf16 %v341, %v340
  %v357 = vpack.c.bf16 %v343, %v342
  %v358 = vpack.c.bf16 %v345, %v344
  %v359 = vpack.c.bf16 %v347, %v346
  %v360 = vpack.c.bf16 %v349, %v348
  %v361 = vpack.c.bf16 %v351, %v350
  %v362 = vpack.c.bf16 %v353, %v352
  %v363 = vpack.c.bf16 %v355, %v354
  %v364 = vld [vmem:[%s3] sm:$0xf]
  %v365 = vld [vmem:[%s3 + $0x4] sm:$0xf]
  %v366 = vld [vmem:[%s3 + $0x8] sm:$0xf]
  %v367 = vld [vmem:[%s3 + $0xc] sm:$0xf]
  %v368 = vld [vmem:[%s3 + $0x10] sm:$0xf]
  %v369 = vld [vmem:[%s3 + $0x14] sm:$0xf]
  %v370 = vld [vmem:[%s3 + $0x18] sm:$0xf]
  %v371 = vld [vmem:[%s3 + $0x1c] sm:$0xf]
  %v372 = vld [vmem:[%s3 + $0x20] sm:$0xf]
  %v373 = vld [vmem:[%s3 + $0x24] sm:$0xf]
  %v374 = vld [vmem:[%s3 + $0x28] sm:$0xf]
  %v375 = vld [vmem:[%s3 + $0x2c] sm:$0xf]
  %v376 = vld [vmem:[%s3 + $0x30] sm:$0xf]
  %v377 = vld [vmem:[%s3 + $0x34] sm:$0xf]
  %v378 = vld [vmem:[%s3 + $0x38] sm:$0xf]
  %v379 = vld [vmem:[%s3 + $0x3c] sm:$0xf]
  %v380 = vld [vmem:[%s4] sm:$0x1]
  %v382 = vlaneseq
  %v383 = vshrl.u32 %v382, 7
  %v384 = vsub.s32 0, %v383
  %v385 = vrot.slane %v380, %v384
  %v403 = vunpack.c.l.b16 %v364
  %v404 = vunpack.c.l.b16 %v365
  %v405 = vunpack.c.l.b16 %v366
  %v406 = vunpack.c.l.b16 %v367
  %v407 = vunpack.c.l.b16 %v368
  %v408 = vunpack.c.l.b16 %v369
  %v409 = vunpack.c.l.b16 %v370
  %v410 = vunpack.c.l.b16 %v371
  %v411 = vunpack.c.l.b16 %v372
  %v412 = vunpack.c.l.b16 %v373
  %v413 = vunpack.c.l.b16 %v374
  %v414 = vunpack.c.l.b16 %v375
  %v415 = vunpack.c.l.b16 %v376
  %v416 = vunpack.c.l.b16 %v377
  %v417 = vunpack.c.l.b16 %v378
  %v418 = vunpack.c.l.b16 %v379
  %v419 = vpack.c.b16 %v404, %v403
  %v420 = vpack.c.b16 %v406, %v405
  %v421 = vpack.c.b16 %v408, %v407
  %v422 = vpack.c.b16 %v410, %v409
  %v423 = vpack.c.b16 %v412, %v411
  %v424 = vpack.c.b16 %v414, %v413
  %v425 = vpack.c.b16 %v416, %v415
  %v426 = vpack.c.b16 %v418, %v417
  %435 = vmatprep.subr.bf16.mxu0 0
  %436 = vmatpush1.bf16.msra.mxu0 %v419
  %437 = vmatprep.subr.bf16.mxu0 0
  %438 = vmatpush1.bf16.msra.mxu0 %v420
  %439 = vmatprep.subr.bf16.mxu0 0
  %440 = vmatpush1.bf16.msra.mxu0 %v421
  %441 = vmatprep.subr.bf16.mxu0 0
  %442 = vmatpush1.bf16.msra.mxu0 %v422
  %443 = vmatprep.subr.bf16.mxu0 0
  %444 = vmatpush1.bf16.msra.mxu0 %v423
  %445 = vmatprep.subr.bf16.mxu0 0
  %446 = vmatpush1.bf16.msra.mxu0 %v424
  %447 = vmatprep.subr.bf16.mxu0 0
  %448 = vmatpush1.bf16.msra.mxu0 %v425
  %449 = vmatprep.subr.bf16.mxu0 0
  %450 = vmatpush1.bf16.msra.mxu0 %v426
  %451 = vmatprep.subr.bf16.mxu0 0
  %452 = vmatpush1.bf16.msra.mxu0 0
  %453 = vmatprep.subr.bf16.mxu0 0
  %454 = vmatpush1.bf16.msra.mxu0 0
  %455 = vmatprep.subr.bf16.mxu0 0
  %456 = vmatpush1.bf16.msra.mxu0 0
  %457 = vmatprep.subr.bf16.mxu0 0
  %458 = vmatpush1.bf16.msra.mxu0 0
  %459 = vmatprep.subr.bf16.mxu0 0
  %460 = vmatpush1.bf16.msra.mxu0 0
  %461 = vmatprep.subr.bf16.mxu0 0
  %462 = vmatpush1.bf16.msra.mxu0 0
  %463 = vmatprep.subr.bf16.mxu0 0
  %464 = vmatpush1.bf16.msra.mxu0 0
  %465 = vmatprep.subr.bf16.mxu0 0
  %466 = vmatpush1.bf16.msra.mxu0 0
  %467 = vmatprep.mubr.bf16.mxu0 0
  %468 = vmatmul.mubr.bf16.gmra.mrb[0].mxu0 %v356
  %v469 = vpop.f32.mrb[0].mxu0
  %v470 = vadd.f32 %v385, %v469
  %v471 = vpop.f32.mrb[0].mxu0
  %v472 = vpop.f32.mrb[0].mxu0
  %v473 = vadd.f32 %v385, %v472
  %v474 = vpop.f32.mrb[0].mxu0
  %475 = vmatprep.mubr.bf16.mxu0 0
  %476 = vmatmul.mubr.bf16.gmra.mrb[0].mxu0 %v357
  %v477 = vpop.f32.mrb[0].mxu0
  %v478 = vadd.f32 %v385, %v477
  %v479 = vpop.f32.mrb[0].mxu0
  %v480 = vpop.f32.mrb[0].mxu0
  %v481 = vadd.f32 %v385, %v480
  %v482 = vpop.f32.mrb[0].mxu0
  %483 = vmatprep.mubr.bf16.mxu0 0
  %484 = vmatmul.mubr.bf16.gmra.mrb[0].mxu0 %v358
  %v485 = vpop.f32.mrb[0].mxu0
  %v486 = vadd.f32 %v385, %v485
  %v487 = vpop.f32.mrb[0].mxu0
  %v488 = vpop.f32.mrb[0].mxu0
  %v489 = vadd.f32 %v385, %v488
  %v490 = vpop.f32.mrb[0].mxu0
  %491 = vmatprep.mubr.bf16.mxu0 0
  %492 = vmatmul.mubr.bf16.gmra.mrb[0].mxu0 %v359
  %v493 = vpop.f32.mrb[0].mxu0
  %v494 = vadd.f32 %v385, %v493
  %v495 = vpop.f32.mrb[0].mxu0
  %v496 = vpop.f32.mrb[0].mxu0
  %v497 = vadd.f32 %v385, %v496
  %v498 = vpop.f32.mrb[0].mxu0
  %499 = vmatprep.mubr.bf16.mxu0 0
  %500 = vmatmul.mubr.bf16.gmra.mrb[0].mxu0 %v360
  %v501 = vpop.f32.mrb[0].mxu0
  %v502 = vadd.f32 %v385, %v501
  %v503 = vpop.f32.mrb[0].mxu0
  %v504 = vpop.f32.mrb[0].mxu0
  %v505 = vadd.f32 %v385, %v504
  %v506 = vpop.f32.mrb[0].mxu0
  %507 = vmatprep.mubr.bf16.mxu0 0
  %508 = vmatmul.mubr.bf16.gmra.mrb[0].mxu0 %v361
  %v509 = vpop.f32.mrb[0].mxu0
  %v510 = vadd.f32 %v385, %v509
  %v511 = vpop.f32.mrb[0].mxu0
  %v512 = vpop.f32.mrb[0].mxu0
  %v513 = vadd.f32 %v385, %v512
  %v514 = vpop.f32.mrb[0].mxu0
  %515 = vmatprep.mubr.bf16.mxu0 0
  %516 = vmatmul.mubr.bf16.gmra.mrb[0].mxu0 %v362
  %v517 = vpop.f32.mrb[0].mxu0
  %v518 = vadd.f32 %v385, %v517
  %v519 = vpop.f32.mrb[0].mxu0
  %v520 = vpop.f32.mrb[0].mxu0
  %v521 = vadd.f32 %v385, %v520
  %v522 = vpop.f32.mrb[0].mxu0
  %523 = vmatprep.mubr.bf16.mxu0 0
  %524 = vmatmul.mubr.bf16.gmra.mrb[0].mxu0 %v363
  %v525 = vpop.f32.mrb[0].mxu0
  %v526 = vadd.f32 %v385, %v525
  %v527 = vpop.f32.mrb[0].mxu0
  %v528 = vpop.f32.mrb[0].mxu0
  %v529 = vadd.f32 %v385, %v528
  %v530 = vpop.f32.mrb[0].mxu0
  %531 = vdwg.mxu0
  %vm532 = vcmp.gt.f32.partialorder %v470, 0.0
  %vm533 = vcmp.gt.f32.partialorder %v473, 0.0
  %vm534 = vcmp.gt.f32.partialorder %v478, 0.0
  %vm535 = vcmp.gt.f32.partialorder %v481, 0.0
  %vm536 = vcmp.gt.f32.partialorder %v486, 0.0
  %vm537 = vcmp.gt.f32.partialorder %v489, 0.0
  %vm538 = vcmp.gt.f32.partialorder %v494, 0.0
  %vm539 = vcmp.gt.f32.partialorder %v497, 0.0
  %vm540 = vcmp.gt.f32.partialorder %v502, 0.0
  %vm541 = vcmp.gt.f32.partialorder %v505, 0.0
  %vm542 = vcmp.gt.f32.partialorder %v510, 0.0
  %vm543 = vcmp.gt.f32.partialorder %v513, 0.0
  %vm544 = vcmp.gt.f32.partialorder %v518, 0.0
  %vm545 = vcmp.gt.f32.partialorder %v521, 0.0
  %vm546 = vcmp.gt.f32.partialorder %v526, 0.0
  %vm547 = vcmp.gt.f32.partialorder %v529, 0.0
  %v548 = vmul.f32 %v470, 0.01
  %v549 = vmul.f32 %v473, 0.01
  %v550 = vmul.f32 %v478, 0.01
  %v551 = vmul.f32 %v481, 0.01
  %v552 = vmul.f32 %v486, 0.01
  %v553 = vmul.f32 %v489, 0.01
  %v554 = vmul.f32 %v494, 0.01
  %v555 = vmul.f32 %v497, 0.01
  %v556 = vmul.f32 %v502, 0.01
  %v557 = vmul.f32 %v505, 0.01
  %v558 = vmul.f32 %v510, 0.01
  %v559 = vmul.f32 %v513, 0.01
  %v560 = vmul.f32 %v518, 0.01
  %v561 = vmul.f32 %v521, 0.01
  %v562 = vmul.f32 %v526, 0.01
  %v563 = vmul.f32 %v529, 0.01
  %v564 = vsel %vm532, %v470, %v548
  %v565 = vsel %vm533, %v473, %v549
  %v566 = vsel %vm534, %v478, %v550
  %v567 = vsel %vm535, %v481, %v551
  %v568 = vsel %vm536, %v486, %v552
  %v569 = vsel %vm537, %v489, %v553
  %v570 = vsel %vm538, %v494, %v554
  %v571 = vsel %vm539, %v497, %v555
  %v572 = vsel %vm540, %v502, %v556
  %v573 = vsel %vm541, %v505, %v557
  %v574 = vsel %vm542, %v510, %v558
  %v575 = vsel %vm543, %v513, %v559
  %v576 = vsel %vm544, %v518, %v560
  %v577 = vsel %vm545, %v521, %v561
  %v578 = vsel %vm546, %v526, %v562
  %v579 = vsel %vm547, %v529, %v563
  %v580 = vpack.c.bf16 %v565, %v564
  %v581 = vpack.c.bf16 %v567, %v566
  %v582 = vpack.c.bf16 %v569, %v568
  %v583 = vpack.c.bf16 %v571, %v570
  %v584 = vpack.c.bf16 %v573, %v572
  %v585 = vpack.c.bf16 %v575, %v574
  %v586 = vpack.c.bf16 %v577, %v576
  %v587 = vpack.c.bf16 %v579, %v578
  %v588 = vld [vmem:[%s5] sm:$0xf]
  %v589 = vld [vmem:[%s5 + $0x4] sm:$0xf]
  %v590 = vld [vmem:[%s5 + $0x8] sm:$0xf]
  %v591 = vld [vmem:[%s5 + $0xc] sm:$0xf]
  %v592 = vld [vmem:[%s5 + $0x10] sm:$0xf]
  %v593 = vld [vmem:[%s5 + $0x14] sm:$0xf]
  %v594 = vld [vmem:[%s5 + $0x18] sm:$0xf]
  %v595 = vld [vmem:[%s5 + $0x1c] sm:$0xf]
  %v596 = vld [vmem:[%s5 + $0x20] sm:$0xf]
  %v597 = vld [vmem:[%s5 + $0x24] sm:$0xf]
  %v598 = vld [vmem:[%s5 + $0x28] sm:$0xf]
  %v599 = vld [vmem:[%s5 + $0x2c] sm:$0xf]
  %v600 = vld [vmem:[%s5 + $0x30] sm:$0xf]
  %v601 = vld [vmem:[%s5 + $0x34] sm:$0xf]
  %v602 = vld [vmem:[%s5 + $0x38] sm:$0xf]
  %v603 = vld [vmem:[%s5 + $0x3c] sm:$0xf]
  %v604 = vld [vmem:[%s6] sm:$0x1]
  %v606 = vlaneseq
  %v607 = vshrl.u32 %v606, 7
  %v608 = vsub.s32 0, %v607
  %v609 = vrot.slane %v604, %v608
  %v627 = vunpack.c.l.b16 %v588
  %v628 = vunpack.c.l.b16 %v589
  %v629 = vunpack.c.l.b16 %v590
  %v630 = vunpack.c.l.b16 %v591
  %v631 = vunpack.c.l.b16 %v592
  %v632 = vunpack.c.l.b16 %v593
  %v633 = vunpack.c.l.b16 %v594
  %v634 = vunpack.c.l.b16 %v595
  %v635 = vunpack.c.l.b16 %v596
  %v636 = vunpack.c.l.b16 %v597
  %v637 = vunpack.c.l.b16 %v598
  %v638 = vunpack.c.l.b16 %v599
  %v639 = vunpack.c.l.b16 %v600
  %v640 = vunpack.c.l.b16 %v601
  %v641 = vunpack.c.l.b16 %v602
  %v642 = vunpack.c.l.b16 %v603
  %v643 = vpack.c.b16 %v628, %v627
  %v644 = vpack.c.b16 %v630, %v629
  %v645 = vpack.c.b16 %v632, %v631
  %v646 = vpack.c.b16 %v634, %v633
  %v647 = vpack.c.b16 %v636, %v635
  %v648 = vpack.c.b16 %v638, %v637
  %v649 = vpack.c.b16 %v640, %v639
  %v650 = vpack.c.b16 %v642, %v641
  %659 = vmatprep.subr.bf16.mxu0 0
  %660 = vmatpush1.bf16.msra.mxu0 %v643
  %661 = vmatprep.subr.bf16.mxu0 0
  %662 = vmatpush1.bf16.msra.mxu0 %v644
  %663 = vmatprep.subr.bf16.mxu0 0
  %664 = vmatpush1.bf16.msra.mxu0 %v645
  %665 = vmatprep.subr.bf16.mxu0 0
  %666 = vmatpush1.bf16.msra.mxu0 %v646
  %667 = vmatprep.subr.bf16.mxu0 0
  %668 = vmatpush1.bf16.msra.mxu0 %v647
  %669 = vmatprep.subr.bf16.mxu0 0
  %670 = vmatpush1.bf16.msra.mxu0 %v648
  %671 = vmatprep.subr.bf16.mxu0 0
  %672 = vmatpush1.bf16.msra.mxu0 %v649
  %673 = vmatprep.subr.bf16.mxu0 0
  %674 = vmatpush1.bf16.msra.mxu0 %v650
  %675 = vmatprep.subr.bf16.mxu0 0
  %676 = vmatpush1.bf16.msra.mxu0 0
  %677 = vmatprep.subr.bf16.mxu0 0
  %678 = vmatpush1.bf16.msra.mxu0 0
  %679 = vmatprep.subr.bf16.mxu0 0
  %680 = vmatpush1.bf16.msra.mxu0 0
  %681 = vmatprep.subr.bf16.mxu0 0
  %682 = vmatpush1.bf16.msra.mxu0 0
  %683 = vmatprep.subr.bf16.mxu0 0
  %684 = vmatpush1.bf16.msra.mxu0 0
  %685 = vmatprep.subr.bf16.mxu0 0
  %686 = vmatpush1.bf16.msra.mxu0 0
  %687 = vmatprep.subr.bf16.mxu0 0
  %688 = vmatpush1.bf16.msra.mxu0 0
  %689 = vmatprep.subr.bf16.mxu0 0
  %690 = vmatpush1.bf16.msra.mxu0 0
  %691 = vmatprep.mubr.bf16.mxu0 0
  %692 = vmatmul.mubr.bf16.gmra.mrb[0].mxu0 %v580
  %v693 = vpop.f32.mrb[0].mxu0
  %v694 = vadd.f32 %v609, %v693
  %v695 = vpop.f32.mrb[0].mxu0
  %v696 = vpop.f32.mrb[0].mxu0
  %v697 = vadd.f32 %v609, %v696
  %v698 = vpop.f32.mrb[0].mxu0
  %699 = vmatprep.mubr.bf16.mxu0 0
  %700 = vmatmul.mubr.bf16.gmra.mrb[0].mxu0 %v581
  %v701 = vpop.f32.mrb[0].mxu0
  %v702 = vadd.f32 %v609, %v701
  %v703 = vpop.f32.mrb[0].mxu0
  %v704 = vpop.f32.mrb[0].mxu0
  %v705 = vadd.f32 %v609, %v704
  %v706 = vpop.f32.mrb[0].mxu0
  %707 = vmatprep.mubr.bf16.mxu0 0
  %708 = vmatmul.mubr.bf16.gmra.mrb[0].mxu0 %v582
  %v709 = vpop.f32.mrb[0].mxu0
  %v710 = vadd.f32 %v609, %v709
  %v711 = vpop.f32.mrb[0].mxu0
  %v712 = vpop.f32.mrb[0].mxu0
  %v713 = vadd.f32 %v609, %v712
  %v714 = vpop.f32.mrb[0].mxu0
  %715 = vmatprep.mubr.bf16.mxu0 0
  %716 = vmatmul.mubr.bf16.gmra.mrb[0].mxu0 %v583
  %v717 = vpop.f32.mrb[0].mxu0
  %v718 = vadd.f32 %v609, %v717
  %v719 = vpop.f32.mrb[0].mxu0
  %v720 = vpop.f32.mrb[0].mxu0
  %v721 = vadd.f32 %v609, %v720
  %v722 = vpop.f32.mrb[0].mxu0
  %723 = vmatprep.mubr.bf16.mxu0 0
  %724 = vmatmul.mubr.bf16.gmra.mrb[0].mxu0 %v584
  %v725 = vpop.f32.mrb[0].mxu0
  %v726 = vadd.f32 %v609, %v725
  %v727 = vpop.f32.mrb[0].mxu0
  %v728 = vpop.f32.mrb[0].mxu0
  %v729 = vadd.f32 %v609, %v728
  %v730 = vpop.f32.mrb[0].mxu0
  %731 = vmatprep.mubr.bf16.mxu0 0
  %732 = vmatmul.mubr.bf16.gmra.mrb[0].mxu0 %v585
  %v733 = vpop.f32.mrb[0].mxu0
  %v734 = vadd.f32 %v609, %v733
  %v735 = vpop.f32.mrb[0].mxu0
  %v736 = vpop.f32.mrb[0].mxu0
  %v737 = vadd.f32 %v609, %v736
  %v738 = vpop.f32.mrb[0].mxu0
  %739 = vmatprep.mubr.bf16.mxu0 0
  %740 = vmatmul.mubr.bf16.gmra.mrb[0].mxu0 %v586
  %v741 = vpop.f32.mrb[0].mxu0
  %v742 = vadd.f32 %v609, %v741
  %v743 = vpop.f32.mrb[0].mxu0
  %v744 = vpop.f32.mrb[0].mxu0
  %v745 = vadd.f32 %v609, %v744
  %v746 = vpop.f32.mrb[0].mxu0
  %747 = vmatprep.mubr.bf16.mxu0 0
  %748 = vmatmul.mubr.bf16.gmra.mrb[0].mxu0 %v587
  %v749 = vpop.f32.mrb[0].mxu0
  %v750 = vadd.f32 %v609, %v749
  %v751 = vpop.f32.mrb[0].mxu0
  %v752 = vpop.f32.mrb[0].mxu0
  %v753 = vadd.f32 %v609, %v752
  %v754 = vpop.f32.mrb[0].mxu0
  %755 = vdwg.mxu0
  %v756 = vlaneseq
  %v757 = vand.u32 %v756, 127
  %vm758 = vcmp.lt.s32.totalorder %v757, 0
  %v759 = vsub.s32 0, %v757
  %v760 = vsel %vm758, %v759, %v757
  %v761 = vmul.u32.u64.compose %v760, 3435973837
  %v762 = vextract.low.u32 %v761
  %v763 = vextract.high.u32 %v761
  %v764 = vshrl.u32 %v763, 2
  %v765 = vmul.u32 %v764, 5
  %v766 = vsub.s32 %v760, %v765
  %v767 = vsub.s32 0, %v766
  %v768 = vsel %vm758, %v767, %v766
  %vm769 = vcmp.ne.s32.totalorder %v768, 0
  %vm770 = vcmp.lt.s32.totalorder %v768, 0
  %vm771 = vmand %vm770, %vm769
  %v772 = vadd.s32 %v768, 5
  %v773 = vsel %vm771, %v772, %v768
  %vm774 = vcmp.lt.s32.totalorder %v757, 45
  %vm775 = vcmp.lt.s32.totalorder %v773, 3
  %vm776 = vmand %vm774, %vm775
  %vm777 = vcmp.eq.s32.totalorder %v773, 1
  %vm778 = vcmp.eq.s32.totalorder %v773, 2
  %vm779 = vmor %vm777, %vm778
  %vm780 = vmand %vm774, %vm779
  %v781 = vsel %vm776, %v694, 0.0
  %v782 = vsel %vm776, %v697, 0.0
  %v783 = vsel %vm776, %v702, 0.0
  %v784 = vsel %vm776, %v705, 0.0
  %v785 = vsel %vm776, %v710, 0.0
  %v786 = vsel %vm776, %v713, 0.0
  %v787 = vsel %vm776, %v718, 0.0
  %v788 = vsel %vm776, %v721, 0.0
  %v789 = vsel %vm776, %v726, 0.0
  %v790 = vsel %vm776, %v729, 0.0
  %v791 = vsel %vm776, %v734, 0.0
  %v792 = vsel %vm776, %v737, 0.0
  %v793 = vsel %vm776, %v742, 0.0
  %v794 = vsel %vm776, %v745, 0.0
  %v795 = vsel %vm776, %v750, 0.0
  %v796 = vsel %vm776, %v753, 0.0
  %v797 = vsub.f32 0.0, %v781
  %v798 = vsub.f32 0.0, %v782
  %v799 = vsub.f32 0.0, %v783
  %v800 = vsub.f32 0.0, %v784
  %v801 = vsub.f32 0.0, %v785
  %v802 = vsub.f32 0.0, %v786
  %v803 = vsub.f32 0.0, %v787
  %v804 = vsub.f32 0.0, %v788
  %v805 = vsub.f32 0.0, %v789
  %v806 = vsub.f32 0.0, %v790
  %v807 = vsub.f32 0.0, %v791
  %v808 = vsub.f32 0.0, %v792
  %v809 = vsub.f32 0.0, %v793
  %v810 = vsub.f32 0.0, %v794
  %v811 = vsub.f32 0.0, %v795
  %v812 = vsub.f32 0.0, %v796
  %v813 = vmul.f32 %v797, 1.442695
  %v814 = vpow.pop %v813
  %v815 = vmul.f32 %v798, 1.442695
  %v816 = vpow.pop %v815
  %v817 = vmul.f32 %v799, 1.442695
  %v818 = vpow.pop %v817
  %v819 = vmul.f32 %v800, 1.442695
  %v820 = vpow.pop %v819
  %v821 = vmul.f32 %v801, 1.442695
  %v822 = vpow.pop %v821
  %v823 = vmul.f32 %v802, 1.442695
  %v824 = vpow.pop %v823
  %v825 = vmul.f32 %v803, 1.442695
  %v826 = vpow.pop %v825
  %v827 = vmul.f32 %v804, 1.442695
  %v828 = vpow.pop %v827
  %v829 = vmul.f32 %v805, 1.442695
  %v830 = vpow.pop %v829
  %v831 = vmul.f32 %v806, 1.442695
  %v832 = vpow.pop %v831
  %v833 = vmul.f32 %v807, 1.442695
  %v834 = vpow.pop %v833
  %v835 = vmul.f32 %v808, 1.442695
  %v836 = vpow.pop %v835
  %v837 = vmul.f32 %v809, 1.442695
  %v838 = vpow.pop %v837
  %v839 = vmul.f32 %v810, 1.442695
  %v840 = vpow.pop %v839
  %v841 = vmul.f32 %v811, 1.442695
  %v842 = vpow.pop %v841
  %v843 = vmul.f32 %v812, 1.442695
  %v844 = vpow.pop %v843
  %v845 = vadd.f32 %v814, 1.0
  %v846 = vadd.f32 %v816, 1.0
  %v847 = vadd.f32 %v818, 1.0
  %v848 = vadd.f32 %v820, 1.0
  %v849 = vadd.f32 %v822, 1.0
  %v850 = vadd.f32 %v824, 1.0
  %v851 = vadd.f32 %v826, 1.0
  %v852 = vadd.f32 %v828, 1.0
  %v853 = vadd.f32 %v830, 1.0
  %v854 = vadd.f32 %v832, 1.0
  %v855 = vadd.f32 %v834, 1.0
  %v856 = vadd.f32 %v836, 1.0
  %v857 = vadd.f32 %v838, 1.0
  %v858 = vadd.f32 %v840, 1.0
  %v859 = vadd.f32 %v842, 1.0
  %v860 = vadd.f32 %v844, 1.0
  %v861 = vrcp.pop %v845
  %v862 = vmul.f32 1.0, %v861
  %v863 = vrcp.pop %v846
  %v864 = vmul.f32 1.0, %v863
  %v865 = vrcp.pop %v847
  %v866 = vmul.f32 1.0, %v865
  %v867 = vrcp.pop %v848
  %v868 = vmul.f32 1.0, %v867
  %v869 = vrcp.pop %v849
  %v870 = vmul.f32 1.0, %v869
  %v871 = vrcp.pop %v850
  %v872 = vmul.f32 1.0, %v871
  %v873 = vrcp.pop %v851
  %v874 = vmul.f32 1.0, %v873
  %v875 = vrcp.pop %v852
  %v876 = vmul.f32 1.0, %v875
  %v877 = vrcp.pop %v853
  %v878 = vmul.f32 1.0, %v877
  %v879 = vrcp.pop %v854
  %v880 = vmul.f32 1.0, %v879
  %v881 = vrcp.pop %v855
  %v882 = vmul.f32 1.0, %v881
  %v883 = vrcp.pop %v856
  %v884 = vmul.f32 1.0, %v883
  %v885 = vrcp.pop %v857
  %v886 = vmul.f32 1.0, %v885
  %v887 = vrcp.pop %v858
  %v888 = vmul.f32 1.0, %v887
  %v889 = vrcp.pop %v859
  %v890 = vmul.f32 1.0, %v889
  %v891 = vrcp.pop %v860
  %v892 = vmul.f32 1.0, %v891
  %v893 = vsel %vm776, %v862, %v694
  %v894 = vsel %vm776, %v864, %v697
  %v895 = vsel %vm776, %v866, %v702
  %v896 = vsel %vm776, %v868, %v705
  %v897 = vsel %vm776, %v870, %v710
  %v898 = vsel %vm776, %v872, %v713
  %v899 = vsel %vm776, %v874, %v718
  %v900 = vsel %vm776, %v876, %v721
  %v901 = vsel %vm776, %v878, %v726
  %v902 = vsel %vm776, %v880, %v729
  %v903 = vsel %vm776, %v882, %v734
  %v904 = vsel %vm776, %v884, %v737
  %v905 = vsel %vm776, %v886, %v742
  %v906 = vsel %vm776, %v888, %v745
  %v907 = vsel %vm776, %v890, %v750
  %v908 = vsel %vm776, %v892, %v753
  %v909 = vsub.f32 %v893, 0.5
  %v910 = vsub.f32 %v894, 0.5
  %v911 = vsub.f32 %v895, 0.5
  %v912 = vsub.f32 %v896, 0.5
  %v913 = vsub.f32 %v897, 0.5
  %v914 = vsub.f32 %v898, 0.5
  %v915 = vsub.f32 %v899, 0.5
  %v916 = vsub.f32 %v900, 0.5
  %v917 = vsub.f32 %v901, 0.5
  %v918 = vsub.f32 %v902, 0.5
  %v919 = vsub.f32 %v903, 0.5
  %v920 = vsub.f32 %v904, 0.5
  %v921 = vsub.f32 %v905, 0.5
  %v922 = vsub.f32 %v906, 0.5
  %v923 = vsub.f32 %v907, 0.5
  %v924 = vsub.f32 %v908, 0.5
  %v925 = vsel %vm780, %v909, %v893
  %v926 = vsel %vm780, %v910, %v894
  %v927 = vsel %vm780, %v911, %v895
  %v928 = vsel %vm780, %v912, %v896
  %v929 = vsel %vm780, %v913, %v897
  %v930 = vsel %vm780, %v914, %v898
  %v931 = vsel %vm780, %v915, %v899
  %v932 = vsel %vm780, %v916, %v900
  %v933 = vsel %vm780, %v917, %v901
  %v934 = vsel %vm780, %v918, %v902
  %v935 = vsel %vm780, %v919, %v903
  %v936 = vsel %vm780, %v920, %v904
  %v937 = vsel %vm780, %v921, %v905
  %v938 = vsel %vm780, %v922, %v906
  %v939 = vsel %vm780, %v923, %v907
  %v940 = vsel %vm780, %v924, %v908
  %941 = vst [vmem:[%s7] sm:$0xff] %v925
  %942 = vst [vmem:[%s7 + $0x8] sm:$0xff] %v926
  %943 = vst [vmem:[%s7 + $0x10] sm:$0xff] %v927
  %944 = vst [vmem:[%s7 + $0x18] sm:$0xff] %v928
  %945 = vst [vmem:[%s7 + $0x20] sm:$0xff] %v929
  %946 = vst [vmem:[%s7 + $0x28] sm:$0xff] %v930
  %947 = vst [vmem:[%s7 + $0x30] sm:$0xff] %v931
  %948 = vst [vmem:[%s7 + $0x38] sm:$0xff] %v932
  %949 = vst [vmem:[%s7 + $0x40] sm:$0xff] %v933
  %950 = vst [vmem:[%s7 + $0x48] sm:$0xff] %v934
  %951 = vst [vmem:[%s7 + $0x50] sm:$0xff] %v935
  %952 = vst [vmem:[%s7 + $0x58] sm:$0xff] %v936
  %953 = vst [vmem:[%s7 + $0x60] sm:$0xff] %v937
  %954 = vst [vmem:[%s7 + $0x68] sm:$0xff] %v938
  %955 = vst [vmem:[%s7 + $0x70] sm:$0xff] %v939
  %956 = vst [vmem:[%s7 + $0x78] sm:$0xff] %v940
  // Predicated region
  $region30: #{single_stage_detector_forward.2} parent=0 // pred_check
    _
  $region31: #{single_stage_detector_forward.2} parent=0 // pred_check_branch
    %958 = sbr.rel (0) target = $region33
  $region32: #{single_stage_detector_forward.2} parent=0 // pred_region
    _
  $region33: #{single_stage_detector_forward.2} parent=0 // pred_fallthru
    _
  // Predicated region
  $region34: #{single_stage_detector_forward.2} parent=0 // pred_check
    _
  $region35: #{single_stage_detector_forward.2} parent=0 // pred_check_branch
    %960 = sbr.rel (0) target = $region37
  $region36: #{single_stage_detector_forward.2} parent=0 // pred_region
    _
  $region37: #{single_stage_detector_forward.2} parent=0 // pred_fallthru
    _

// kernel: neg.0
$region0: #{neg.0}
  #allocation0 [shape = 's32[1]{0}', space=sflag, size = 0x4, scoped, tag = 'scoped memory for neg.0']
  %s0 = inlined_call_operand.vmem [shape: f32[2,441], index: 0, kind: input, shape index: {}]
  %s1 = inlined_call_operand.vmem [shape: f32[2,441], index: 1, kind: output, shape index: {}]
  %v2 = vld [vmem:[%s0] sm:$0x3]
  %3 = xla_tuple %v2
  %4 = xla_tuple %3
  %v5 = vxor.u32 %v2, 2147483648
  %6 = xla_tuple %v5
  %7 = vst [vmem:[%s1] sm:$0x3] %v5
  %s8 = scalar_lea.vmem %s0, 2
  %v9 = vld [vmem:[%s8] sm:$0x3]
  %10 = xla_tuple %v9
  %11 = xla_tuple %10
  %v12 = vxor.u32 %v9, 2147483648
  %13 = xla_tuple %v12
  %s14 = scalar_lea.vmem %s1, 2
  %15 = vst [vmem:[%s14] sm:$0x3] %v12
  %s16 = scalar_lea.vmem %s0, 4
  %v17 = vld [vmem:[%s16] sm:$0x3]
  %18 = xla_tuple %v17
  %19 = xla_tuple %18
  %v20 = vxor.u32 %v17, 2147483648
  %21 = xla_tuple %v20
  %s22 = scalar_lea.vmem %s1, 4
  %23 = vst [vmem:[%s22] sm:$0x3] %v20
  %s24 = scalar_lea.vmem %s0, 6
  %v25 = vld [vmem:[%s24] sm:$0x3]
  %26 = xla_tuple %v25
  %27 = xla_tuple %26
  %v28 = vxor.u32 %v25, 2147483648
  %29 = xla_tuple %v28
  %s30 = scalar_lea.vmem %s1, 6
  %31 = vst [vmem:[%s30] sm:$0x3] %v28

// kernel: single_stage_detector_forward.3
$region0: #{single_stage_detector_forward.3}
  #allocation0 [shape = 'u32[]', space=smem, size = 0x4, offset = 0x4, fixed_abs, tag = 'smem constant byte address 0x4 - core index']
  #allocation1 [shape = 'u32[144,128]{1,0:T(1,128)}', space=vmem, size = 0x12000, scoped, tag = 'internal scratch']
  %s0 = inlined_call_operand.vmem [shape: f32[4,2,512], index: 0, kind: input, shape index: {}]
  %s1 = inlined_call_operand.vmem [shape: f32[2,3,5], index: 1, kind: input, shape index: {}]
  %s2 = inlined_call_operand.vmem [shape: f32[2,3,512], index: 2, kind: output, shape index: {}]
  %s3 = sld [smem:[#allocation0]]
  $region18: #{single_stage_detector_forward.3} parent=0
    _
  %s5 = ssub.s32 1, %s3
  %s6 = scalar_select 0, %s5, %s3
  // Predicated region
  $region2: #{single_stage_detector_forward.3} parent=0 // pred_check
    _
  $region3: #{single_stage_detector_forward.3} parent=0 // pred_check_branch
    %8 = sbr.rel (0) target = $region5
  $region4: #{single_stage_detector_forward.3} parent=0 // pred_region
    _
  $region5: #{single_stage_detector_forward.3} parent=0 // pred_fallthru
    _
  // Predicated region
  $region6: #{single_stage_detector_forward.3} parent=0 // pred_check
    _
  $region7: #{single_stage_detector_forward.3} parent=0 // pred_check_branch
    %10 = sbr.rel (0) target = $region9
  $region8: #{single_stage_detector_forward.3} parent=0 // pred_region
    _
  $region9: #{single_stage_detector_forward.3} parent=0 // pred_fallthru
    _
  %v11 = vld [vmem:[%s0] sm:$0xff]
  %v12 = vld [vmem:[%s0 + $0x8] sm:$0xff]
  %v13 = vld [vmem:[%s0 + $0x10] sm:$0xff]
  %v14 = vld [vmem:[%s0 + $0x18] sm:$0xff]
  %v15 = vld [vmem:[%s1] sm:$0x7]
  %v16 = vld [vmem:[%s1 + $0x4] sm:$0x7]
  %v19 = vunpack.c.l.s4 1966171168
  %v20 = vunpack.c.0.s8 %v19
  %v21 = vlaneseq
  %v22 = vshrl.u32 %v21, 7
  %v23 = vsub.s32 %v20, %v22
  %v24 = vrot.slane %v11, %v23
  %v25 = vcombine.high %v24, %v24
  %v30 = vunpack.c.l.s4 1966171168
  %v31 = vunpack.c.0.s8 %v30
  %v32 = vlaneseq
  %v33 = vshrl.u32 %v32, 7
  %v34 = vsub.s32 %v31, %v33
  %v35 = vrot.slane %v12, %v34
  %v36 = vcombine.high %v35, %v35
  %v41 = vunpack.c.l.s4 1966171168
  %v42 = vunpack.c.0.s8 %v41
  %v43 = vlaneseq
  %v44 = vshrl.u32 %v43, 7
  %v45 = vsub.s32 %v42, %v44
  %v46 = vrot.slane %v13, %v45
  %v47 = vcombine.high %v46, %v46
  %v52 = vunpack.c.l.s4 1966171168
  %v53 = vunpack.c.0.s8 %v52
  %v54 = vlaneseq
  %v55 = vshrl.u32 %v54, 7
  %v56 = vsub.s32 %v53, %v55
  %v57 = vrot.slane %v14, %v56
  %v58 = vcombine.high %v57, %v57
  %v61 = vlaneseq
  %v62 = vshrl.u32 %v61, 7
  %v63 = vsub.s32 0, %v62
  %v64 = vrot.slane %v24, %v63
  %v65 = vlaneseq
  %v66 = vshrl.u32 %v65, 7
  %v67 = vsub.s32 1, %v66
  %v68 = vrot.slane %v24, %v67
  %v69 = vlaneseq
  %v70 = vshrl.u32 %v69, 7
  %v71 = vsub.s32 2, %v70
  %v72 = vrot.slane %v24, %v71
  %v73 = vlaneseq
  %v74 = vshrl.u32 %v73, 7
  %v75 = vsub.s32 3, %v74
  %v76 = vrot.slane %v24, %v75
  %v77 = vlaneseq
  %v78 = vshrl.u32 %v77, 7
  %v79 = vsub.s32 0, %v78
  %v80 = vrot.slane %v25, %v79
  %v81 = vlaneseq
  %v82 = vshrl.u32 %v81, 7
  %v83 = vsub.s32 1, %v82
  %v84 = vrot.slane %v25, %v83
  %v85 = vlaneseq
  %v86 = vshrl.u32 %v85, 7
  %v87 = vsub.s32 2, %v86
  %v88 = vrot.slane %v25, %v87
  %v89 = vlaneseq
  %v90 = vshrl.u32 %v89, 7
  %v91 = vsub.s32 3, %v90
  %v92 = vrot.slane %v25, %v91
  %102 = vset.pattern.permute.xlu0 0
  %103 = vperm.xlu0 %102, %v15
  %v104 = vpop.permute.xlu0 %103
  %107 = vset.pattern.permute.xlu0 0
  %108 = vperm.xlu0 %107, %v16
  %v109 = vpop.permute.xlu0 %108
  %v111 = vmax.f32 %v64, %v104
  %v112 = vmax.f32 %v68, %v104
  %v113 = vmax.f32 %v72, %v104
  %v114 = vmax.f32 %v76, %v104
  %v115 = vmax.f32 %v80, %v109
  %v116 = vmax.f32 %v84, %v109
  %v117 = vmax.f32 %v88, %v109
  %v118 = vmax.f32 %v92, %v109
  %v119 = vlaneseq
  %v120 = vshrl.u32 %v119, 7
  %v121 = vsub.s32 0, %v120
  %v122 = vrot.slane %v35, %v121
  %v123 = vlaneseq
  %v124 = vshrl.u32 %v123, 7
  %v125 = vsub.s32 1, %v124
  %v126 = vrot.slane %v35, %v125
  %v127 = vlaneseq
  %v128 = vshrl.u32 %v127, 7
  %v129 = vsub.s32 2, %v128
  %v130 = vrot.slane %v35, %v129
  %v131 = vlaneseq
  %v132 = vshrl.u32 %v131, 7
  %v133 = vsub.s32 3, %v132
  %v134 = vrot.slane %v35, %v133
  %v135 = vlaneseq
  %v136 = vshrl.u32 %v135, 7
  %v137 = vsub.s32 0, %v136
  %v138 = vrot.slane %v36, %v137
  %v139 = vlaneseq
  %v140 = vshrl.u32 %v139, 7
  %v141 = vsub.s32 1, %v140
  %v142 = vrot.slane %v36, %v141
  %v143 = vlaneseq
  %v144 = vshrl.u32 %v143, 7
  %v145 = vsub.s32 2, %v144
  %v146 = vrot.slane %v36, %v145
  %v147 = vlaneseq
  %v148 = vshrl.u32 %v147, 7
  %v149 = vsub.s32 3, %v148
  %v150 = vrot.slane %v36, %v149
  %159 = vset.pattern.permute.xlu0 1
  %160 = vperm.xlu0 %159, %v15
  %v161 = vpop.permute.xlu0 %160
  %163 = vset.pattern.permute.xlu0 1
  %164 = vperm.xlu0 %163, %v16
  %v165 = vpop.permute.xlu0 %164
  %v167 = vmax.f32 %v122, %v161
  %v168 = vmax.f32 %v126, %v161
  %v169 = vmax.f32 %v130, %v161
  %v170 = vmax.f32 %v134, %v161
  %v171 = vmax.f32 %v138, %v165
  %v172 = vmax.f32 %v142, %v165
  %v173 = vmax.f32 %v146, %v165
  %v174 = vmax.f32 %v150, %v165
  %v175 = vlaneseq
  %v176 = vshrl.u32 %v175, 7
  %v177 = vsub.s32 0, %v176
  %v178 = vrot.slane %v46, %v177
  %v179 = vlaneseq
  %v180 = vshrl.u32 %v179, 7
  %v181 = vsub.s32 1, %v180
  %v182 = vrot.slane %v46, %v181
  %v183 = vlaneseq
  %v184 = vshrl.u32 %v183, 7
  %v185 = vsub.s32 2, %v184
  %v186 = vrot.slane %v46, %v185
  %v187 = vlaneseq
  %v188 = vshrl.u32 %v187, 7
  %v189 = vsub.s32 3, %v188
  %v190 = vrot.slane %v46, %v189
  %v191 = vlaneseq
  %v192 = vshrl.u32 %v191, 7
  %v193 = vsub.s32 0, %v192
  %v194 = vrot.slane %v47, %v193
  %v195 = vlaneseq
  %v196 = vshrl.u32 %v195, 7
  %v197 = vsub.s32 1, %v196
  %v198 = vrot.slane %v47, %v197
  %v199 = vlaneseq
  %v200 = vshrl.u32 %v199, 7
  %v201 = vsub.s32 2, %v200
  %v202 = vrot.slane %v47, %v201
  %v203 = vlaneseq
  %v204 = vshrl.u32 %v203, 7
  %v205 = vsub.s32 3, %v204
  %v206 = vrot.slane %v47, %v205
  %215 = vset.pattern.permute.xlu0 2
  %216 = vperm.xlu0 %215, %v15
  %v217 = vpop.permute.xlu0 %216
  %219 = vset.pattern.permute.xlu0 2
  %220 = vperm.xlu0 %219, %v16
  %v221 = vpop.permute.xlu0 %220
  %v223 = vmin.f32 %v178, %v217
  %v224 = vmin.f32 %v182, %v217
  %v225 = vmin.f32 %v186, %v217
  %v226 = vmin.f32 %v190, %v217
  %v227 = vmin.f32 %v194, %v221
  %v228 = vmin.f32 %v198, %v221
  %v229 = vmin.f32 %v202, %v221
  %v230 = vmin.f32 %v206, %v221
  %v231 = vlaneseq
  %v232 = vshrl.u32 %v231, 7
  %v233 = vsub.s32 0, %v232
  %v234 = vrot.slane %v57, %v233
  %v235 = vlaneseq
  %v236 = vshrl.u32 %v235, 7
  %v237 = vsub.s32 1, %v236
  %v238 = vrot.slane %v57, %v237
  %v239 = vlaneseq
  %v240 = vshrl.u32 %v239, 7
  %v241 = vsub.s32 2, %v240
  %v242 = vrot.slane %v57, %v241
  %v243 = vlaneseq
  %v244 = vshrl.u32 %v243, 7
  %v245 = vsub.s32 3, %v244
  %v246 = vrot.slane %v57, %v245
  %v247 = vlaneseq
  %v248 = vshrl.u32 %v247, 7
  %v249 = vsub.s32 0, %v248
  %v250 = vrot.slane %v58, %v249
  %v251 = vlaneseq
  %v252 = vshrl.u32 %v251, 7
  %v253 = vsub.s32 1, %v252
  %v254 = vrot.slane %v58, %v253
  %v255 = vlaneseq
  %v256 = vshrl.u32 %v255, 7
  %v257 = vsub.s32 2, %v256
  %v258 = vrot.slane %v58, %v257
  %v259 = vlaneseq
  %v260 = vshrl.u32 %v259, 7
  %v261 = vsub.s32 3, %v260
  %v262 = vrot.slane %v58, %v261
  %271 = vset.pattern.permute.xlu0 3
  %272 = vperm.xlu0 %271, %v15
  %v273 = vpop.permute.xlu0 %272
  %275 = vset.pattern.permute.xlu0 3
  %276 = vperm.xlu0 %275, %v16
  %v277 = vpop.permute.xlu0 %276
  %v279 = vmin.f32 %v234, %v273
  %v280 = vmin.f32 %v238, %v273
  %v281 = vmin.f32 %v242, %v273
  %v282 = vmin.f32 %v246, %v273
  %v283 = vmin.f32 %v250, %v277
  %v284 = vmin.f32 %v254, %v277
  %v285 = vmin.f32 %v258, %v277
  %v286 = vmin.f32 %v262, %v277
  %v287 = vsub.f32 %v223, %v111
  %v288 = vsub.f32 %v224, %v112
  %v289 = vsub.f32 %v225, %v113
  %v290 = vsub.f32 %v226, %v114
  %v291 = vsub.f32 %v227, %v115
  %v292 = vsub.f32 %v228, %v116
  %v293 = vsub.f32 %v229, %v117
  %v294 = vsub.f32 %v230, %v118
  %v295 = vmax.f32 %v287, 0.0
  %v296 = vmax.f32 %v288, 0.0
  %v297 = vmax.f32 %v289, 0.0
  %v298 = vmax.f32 %v290, 0.0
  %v299 = vmax.f32 %v291, 0.0
  %v300 = vmax.f32 %v292, 0.0
  %v301 = vmax.f32 %v293, 0.0
  %v302 = vmax.f32 %v294, 0.0
  %v303 = vsub.f32 %v279, %v167
  %v304 = vsub.f32 %v280, %v168
  %v305 = vsub.f32 %v281, %v169
  %v306 = vsub.f32 %v282, %v170
  %v307 = vsub.f32 %v283, %v171
  %v308 = vsub.f32 %v284, %v172
  %v309 = vsub.f32 %v285, %v173
  %v310 = vsub.f32 %v286, %v174
  %v311 = vmax.f32 %v303, 0.0
  %v312 = vmax.f32 %v304, 0.0
  %v313 = vmax.f32 %v305, 0.0
  %v314 = vmax.f32 %v306, 0.0
  %v315 = vmax.f32 %v307, 0.0
  %v316 = vmax.f32 %v308, 0.0
  %v317 = vmax.f32 %v309, 0.0
  %v318 = vmax.f32 %v310, 0.0
  %v319 = vmul.f32 %v295, %v311
  %v320 = vmul.f32 %v296, %v312
  %v321 = vmul.f32 %v297, %v313
  %v322 = vmul.f32 %v298, %v314
  %v323 = vmul.f32 %v299, %v315
  %v324 = vmul.f32 %v300, %v316
  %v325 = vmul.f32 %v301, %v317
  %v326 = vmul.f32 %v302, %v318
  %v327 = vsub.f32 %v46, %v24
  %v328 = vsub.f32 %v47, %v25
  %v329 = vsub.f32 %v57, %v35
  %v330 = vsub.f32 %v58, %v36
  %v331 = vmul.f32 %v327, %v329
  %v332 = vmul.f32 %v328, %v330
  %333 = vrot.lane.b32.xlu0 %v15, 2
  %v334 = vpop.permute.xlu0 %333
  %335 = vrot.lane.b32.xlu0 %v16, 2
  %v336 = vpop.permute.xlu0 %335
  %v339 = vsub.f32 %v15, %v334
  %v340 = vsub.f32 %v16, %v336
  %343 = vrot.lane.b32.xlu0 %v339, 127
  %v344 = vpop.permute.xlu0 %343
  %345 = vrot.lane.b32.xlu0 %v340, 127
  %v346 = vpop.permute.xlu0 %345
  %v349 = vmul.f32 %v339, %v344
  %v350 = vmul.f32 %v340, %v346
  %v353 = vlaneseq
  %v354 = vshrl.u32 %v353, 7
  %v355 = vsub.s32 0, %v354
  %v356 = vrot.slane %v331, %v355
  %v357 = vlaneseq
  %v358 = vshrl.u32 %v357, 7
  %v359 = vsub.s32 1, %v358
  %v360 = vrot.slane %v331, %v359
  %v361 = vlaneseq
  %v362 = vshrl.u32 %v361, 7
  %v363 = vsub.s32 2, %v362
  %v364 = vrot.slane %v331, %v363
  %v365 = vlaneseq
  %v366 = vshrl.u32 %v365, 7
  %v367 = vsub.s32 3, %v366
  %v368 = vrot.slane %v331, %v367
  %v369 = vlaneseq
  %v370 = vshrl.u32 %v369, 7
  %v371 = vsub.s32 0, %v370
  %v372 = vrot.slane %v332, %v371
  %v373 = vlaneseq
  %v374 = vshrl.u32 %v373, 7
  %v375 = vsub.s32 1, %v374
  %v376 = vrot.slane %v332, %v375
  %v377 = vlaneseq
  %v378 = vshrl.u32 %v377, 7
  %v379 = vsub.s32 2, %v378
  %v380 = vrot.slane %v332, %v379
  %v381 = vlaneseq
  %v382 = vshrl.u32 %v381, 7
  %v383 = vsub.s32 3, %v382
  %v384 = vrot.slane %v332, %v383
  %394 = vset.pattern.permute.xlu0 2
  %395 = vperm.xlu0 %394, %v349
  %v396 = vpop.permute.xlu0 %395
  %399 = vset.pattern.permute.xlu0 2
  %400 = vperm.xlu0 %399, %v350
  %v401 = vpop.permute.xlu0 %400
  %v403 = vadd.f32 %v356, %v396
  %v404 = vadd.f32 %v360, %v396
  %v405 = vadd.f32 %v364, %v396
  %v406 = vadd.f32 %v368, %v396
  %v407 = vadd.f32 %v372, %v401
  %v408 = vadd.f32 %v376, %v401
  %v409 = vadd.f32 %v380, %v401
  %v410 = vadd.f32 %v384, %v401
  %v411 = vsub.f32 %v403, %v319
  %v412 = vsub.f32 %v404, %v320
  %v413 = vsub.f32 %v405, %v321
  %v414 = vsub.f32 %v406, %v322
  %v415 = vsub.f32 %v407, %v323
  %v416 = vsub.f32 %v408, %v324
  %v417 = vsub.f32 %v409, %v325
  %v418 = vsub.f32 %v410, %v326
  %v419 = vmax.f32 %v411, 1e-08
  %v420 = vmax.f32 %v412, 1e-08
  %v421 = vmax.f32 %v413, 1e-08
  %v422 = vmax.f32 %v414, 1e-08
  %v423 = vmax.f32 %v415, 1e-08
  %v424 = vmax.f32 %v416, 1e-08
  %v425 = vmax.f32 %v417, 1e-08
  %v426 = vmax.f32 %v418, 1e-08
  %v427 = vrcp.pop %v419
  %v428 = vmul.f32 %v319, %v427
  %v429 = vrcp.pop %v420
  %v430 = vmul.f32 %v320, %v429
  %v431 = vrcp.pop %v421
  %v432 = vmul.f32 %v321, %v431
  %v433 = vrcp.pop %v422
  %v434 = vmul.f32 %v322, %v433
  %v435 = vrcp.pop %v423
  %v436 = vmul.f32 %v323, %v435
  %v437 = vrcp.pop %v424
  %v438 = vmul.f32 %v324, %v437
  %v439 = vrcp.pop %v425
  %v440 = vmul.f32 %v325, %v439
  %v441 = vrcp.pop %v426
  %v442 = vmul.f32 %v326, %v441
  %v451 = vcombine.low %v428, %v430
  %v452 = vcombine.low %v432, %v434
  %v453 = vcombine.low %v436, %v438
  %v454 = vcombine.low %v440, %v442
  %459 = vst [vmem:[%s2] sm:$0x77] %v451
  %460 = vst [vmem:[%s2 + $0x8] sm:$0x77] %v452
  %461 = vst [vmem:[%s2 + $0x10] sm:$0x77] %v453
  %462 = vst [vmem:[%s2 + $0x18] sm:$0x77] %v454
  // Predicated region
  $region10: #{single_stage_detector_forward.3} parent=0 // pred_check
    _
  $region11: #{single_stage_detector_forward.3} parent=0 // pred_check_branch
    %464 = sbr.rel (0) target = $region13
  $region12: #{single_stage_detector_forward.3} parent=0 // pred_region
    _
  $region13: #{single_stage_detector_forward.3} parent=0 // pred_fallthru
    _
  // Predicated region
  $region14: #{single_stage_detector_forward.3} parent=0 // pred_check
    _
  $region15: #{single_stage_detector_forward.3} parent=0 // pred_check_branch
    %466 = sbr.rel (0) target = $region17
  $region16: #{single_stage_detector_forward.3} parent=0 // pred_region
    _
  $region17: #{single_stage_detector_forward.3} parent=0 // pred_fallthru
    _

</llo_original>
